<compile_context>
chip_gen: v5e
topology: v5e:2x2
jax: 0.10.0
libtpu: 0.0.40
codegen_flags: <defaults>
</compile_context>

<pallas_src>
import functools

import jax
import jax.numpy as jnp
from jax import lax
from jax.experimental import pallas as pl
from jax.experimental.pallas import tpu as pltpu

_INV_SQRT2 = 0.7071067811865476       # 1/sqrt(2)
_SQRT_2_OVER_PI = 0.7978845608028654  # sqrt(2/pi)


def _gelu(h, approximate):
    if approximate:
        # tanh approximation -> EUP slot (nearly free); deviates slightly from
        # torch.nn.GELU()'s exact erf default, so it is opt-in.
        return 0.5 * h * (1.0 + jnp.tanh(_SQRT_2_OVER_PI * (h + 0.044715 * h * h * h)))
    return 0.5 * h * (1.0 + lax.erf(h * _INV_SQRT2))


def _ffn_kernel_resident(x_ref, w1_ref, b1_ref, w2_ref, b2_ref, o_ref, *, approximate):
    # Whole hidden dim per step: no reduction axis, no accumulator.
    h = jnp.dot(x_ref[...], w1_ref[...], preferred_element_type=jnp.float32)
    h = h + b1_ref[...].astype(jnp.float32)
    h = _gelu(h, approximate)
    out = jnp.dot(h.astype(w2_ref.dtype), w2_ref[...],
                  preferred_element_type=jnp.float32)
    o_ref[...] = (out + b2_ref[...].astype(jnp.float32)).astype(o_ref.dtype)


def _ffn_kernel_ktiled(x_ref, w1_ref, b1_ref, w2_ref, b2_ref, o_ref, acc_ref, *,
                       approximate):
    # Hidden dim tiled on grid axis 1 (reduction, last); f32 accumulator scratch.
    k = pl.program_id(1)

    @pl.when(k == 0)
    def _init():
        acc_ref[...] = jnp.zeros_like(acc_ref)

    h = jnp.dot(x_ref[...], w1_ref[...], preferred_element_type=jnp.float32)
    h = h + b1_ref[...].astype(jnp.float32)
    h = _gelu(h, approximate)
    acc_ref[...] += jnp.dot(h.astype(w2_ref.dtype), w2_ref[...],
                            preferred_element_type=jnp.float32)

    @pl.when(k == pl.num_programs(1) - 1)
    def _finalize():
        o_ref[...] = (acc_ref[...] + b2_ref[...].astype(jnp.float32)).astype(o_ref.dtype)


def _round_up(x, n):
    return ((x + n - 1) // n) * n


def _sublane_multiple(dtype):
    # native sublane packing: 8 rows for 32-bit, 16 for 16-bit, 32 for 8-bit.
    return max(8, 32 // jnp.dtype(dtype).itemsize)


def _vmem_capacity_bytes():
    # Per-TensorCore VMEM: v5e/v6e 128 MiB, v7x 64 MiB. Query if possible, else
    # fall back to the most conservative (v7x) value.
    cap = 64 << 20
    try:
        info = pltpu.get_tpu_info()
        cap = int(getattr(info, "vmem_capacity_bytes", cap))
    except Exception:
        pass
    return cap


def _vmem_footprint(tm, tk, d_in, x_it, w_it, o_it, ktiled):
    x_b = 2 * tm * d_in * x_it                    # double-buffered x row tile
    o_b = 2 * tm * d_in * o_it                    # double-buffered out row tile
    w_b = 2 * (d_in * tk + tk * d_in) * w_it      # double-buffered W1/W2 blocks
    b_b = 2 * 8 * (tk + d_in) * w_it              # bias blocks (8-sublane padded)
    h_b = tm * tk * (4 + w_it)                    # f32 intermediate + cast copy
    acc_b = tm * d_in * 4 if ktiled else 0        # f32 accumulator scratch
    return x_b + o_b + w_b + b_b + h_b + acc_b


@functools.partial(
    jax.jit, static_argnames=("tm", "tk", "approximate_gelu", "vmem_budget_bytes"))
def position_wise_ffn(x, w1, b1, w2, b2, *, tm=512, tk=1024,
                      approximate_gelu=False, vmem_budget_bytes=None):
    """x: (..., d_in) -> (..., d_in).  w1: (d_in, d_hid), w2: (d_hid, d_in)."""
    *lead, d_in = x.shape
    d_hid = w1.shape[1]
    m = 1
    for s in lead:
        m *= s

    x_it = jnp.dtype(x.dtype).itemsize
    w_it = jnp.dtype(w1.dtype).itemsize
    o_it = x_it
    sub = _sublane_multiple(x.dtype)

    cap = _vmem_capacity_bytes()
    budget = int(vmem_budget_bytes) if vmem_budget_bytes is not None else (cap * 3) // 4

    # Lane-dense padding of feature dims (cheap no-op when already 128-aligned).
    d_in_p = _round_up(d_in, 128)
    d_hid_p = _round_up(d_hid, 128)

    # ---- row tile: dtype-aware sublane multiple, never larger than padded M ----
    tm_eff = max(sub, min(tm, _round_up(m, sub)))
    tm_eff = _round_up(tm_eff, sub)
    m_pad = _round_up(m, tm_eff)
    # megacore: make sure both v7x TensorCores get at least one row tile.
    while m_pad // tm_eff < 2 and tm_eff >= 2 * sub:
        tm_eff = _round_up(tm_eff // 2, sub)
        m_pad = _round_up(m, tm_eff)

    # ---- path selection: weights-resident (tk = d_hid) if it fits VMEM budget ----
    resident = False
    tm_res = tm_eff
    while True:
        if _vmem_footprint(tm_res, d_hid_p, d_in_p, x_it, w_it, o_it,
                           ktiled=False) <= budget:
            resident = True
            break
        if tm_res <= max(sub, 128):
            break
        tm_res = max(_round_up(tm_res // 2, sub), sub)

    if resident:
        tm_eff = tm_res
        m_pad = _round_up(m, tm_eff)
        tk_eff = d_hid_p
    else:
        # k-tiled fallback: largest 128-multiple divisor of d_hid_p that is <= tk
        # and fits the budget (128 always divides since d_hid_p is 128-aligned).
        tk_eff = None
        for c in range(d_hid_p, 0, -128):
            if d_hid_p % c != 0:
                continue
            if c <= max(tk, 128) and _vmem_footprint(
                    tm_eff, c, d_in_p, x_it, w_it, o_it, ktiled=True) <= budget:
                tk_eff = c
                break
        if tk_eff is None:
            tk_eff = 128

    # ---- pad operands ----
    pad_m = m_pad - m
    pad_din = d_in_p - d_in
    pad_hid = d_hid_p - d_hid

    x2d = x.reshape(m, d_in)
    if pad_m or pad_din:
        x2d = jnp.pad(x2d, ((0, pad_m), (0, pad_din)))
    w1p = jnp.pad(w1, ((0, pad_din), (0, pad_hid))) if (pad_din or pad_hid) else w1
    w2p = jnp.pad(w2, ((0, pad_hid), (0, pad_din))) if (pad_hid or pad_din) else w2
    b1p = (jnp.pad(b1, (0, pad_hid)) if pad_hid else b1).reshape(1, d_hid_p)
    b2p = (jnp.pad(b2, (0, pad_din)) if pad_din else b2).reshape(1, d_in_p)

    # ---- specs / grid ----
    if resident:
        grid = (m_pad // tm_eff,)
        dims = ("parallel",)
        kernel = functools.partial(_ffn_kernel_resident, approximate=approximate_gelu)
        in_specs = [
            pl.BlockSpec((tm_eff, d_in_p), lambda i: (i, 0)),     # x row tile
            pl.BlockSpec((d_in_p, d_hid_p), lambda i: (0, 0)),    # W1 (resident)
            pl.BlockSpec((1, d_hid_p), lambda i: (0, 0)),         # b1 (resident)
            pl.BlockSpec((d_hid_p, d_in_p), lambda i: (0, 0)),    # W2 (resident)
            pl.BlockSpec((1, d_in_p), lambda i: (0, 0)),          # b2 (resident)
        ]
        out_specs = pl.BlockSpec((tm_eff, d_in_p), lambda i: (i, 0))
        scratch = []
    else:
        grid = (m_pad // tm_eff, d_hid_p // tk_eff)
        dims = ("parallel", "arbitrary")
        kernel = functools.partial(_ffn_kernel_ktiled, approximate=approximate_gelu)
        in_specs = [
            pl.BlockSpec((tm_eff, d_in_p), lambda i, k: (i, 0)),  # x row tile
            pl.BlockSpec((d_in_p, tk_eff), lambda i, k: (0, k)),  # W1 hidden chunk
            pl.BlockSpec((1, tk_eff), lambda i, k: (0, k)),       # b1 hidden chunk
            pl.BlockSpec((tk_eff, d_in_p), lambda i, k: (k, 0)),  # W2 hidden chunk
            pl.BlockSpec((1, d_in_p), lambda i, k: (0, 0)),       # b2 (full)
        ]
        out_specs = pl.BlockSpec((tm_eff, d_in_p), lambda i, k: (i, 0))
        scratch = [pltpu.VMEM((tm_eff, d_in_p), jnp.float32)]

    footprint = _vmem_footprint(tm_eff, tk_eff, d_in_p, x_it, w_it, o_it,
                                ktiled=not resident)
    vmem_limit = int(min(cap, max(footprint + (4 << 20), 32 << 20)))

    # Advisory cost estimate with *actual* HBM traffic (weights re-streamed once
    # per row tile on the k-tiled path, exactly once on the resident path).
    weight_bytes = (w1p.size + w2p.size + b1p.size + b2p.size) * w_it
    weight_passes = 1 if resident else (m_pad // tm_eff)
    bytes_accessed = (m_pad * d_in_p * x_it          # x read
                      + m_pad * d_in_p * o_it        # out write
                      + weight_bytes * weight_passes)

    out2d = pl.pallas_call(
        kernel,
        out_shape=jax.ShapeDtypeStruct((m_pad, d_in_p), x.dtype),
        grid_spec=pltpu.PrefetchScalarGridSpec(
            num_scalar_prefetch=0,
            grid=grid,
            in_specs=in_specs,
            out_specs=out_specs,
            scratch_shapes=scratch),
        compiler_params=pltpu.CompilerParams(
            dimension_semantics=dims,
            vmem_limit_bytes=vmem_limit),
        cost_estimate=pl.CostEstimate(
            flops=4 * m_pad * d_in_p * d_hid_p,
            transcendentals=m_pad * d_hid_p,
            bytes_accessed=int(bytes_accessed)),
    )(x2d, w1p, b1p, w2p, b2p)

    if pad_m:
        out2d = out2d[:m]
    if pad_din:
        out2d = out2d[:, :d_in]
    return out2d.reshape(*lead, d_in)


def _reference(x, w1, b1, w2, b2):
    h = x @ w1 + b1
    h = 0.5 * h * (1.0 + lax.erf(h / jnp.sqrt(2.0)))
    return h @ w2 + b2


if __name__ == "__main__":
    # Small, lane-dense shapes consistent with the module (scaled-down BERT FFN).
    batch, seq = 2, 64
    ffn_inputs, ffn_hiddens = 128, 512

    key = jax.random.PRNGKey(0)
    kx, kw1, kb1, kw2, kb2 = jax.random.split(key, 5)

    x = jax.random.normal(kx, (batch, seq, ffn_inputs), dtype=jnp.float32)

    # Kernel weight layout: (in_features, out_features) == torch weight.T
    w1 = jax.random.normal(kw1, (ffn_inputs, ffn_hiddens), jnp.float32) * 0.02
    b1 = jax.random.normal(kb1, (ffn_hiddens,), jnp.float32) * 0.02
    w2 = jax.random.normal(kw2, (ffn_hiddens, ffn_inputs), jnp.float32) * 0.02
    b2 = jax.random.normal(kb2, (ffn_inputs,), jnp.float32) * 0.02

    ref = _reference(x, w1, b1, w2, b2)

    # Path 1: weights-resident fast path (default VMEM budget) — single step per
    # row tile, weights DMA'd once, no accumulator.
    out = jax.block_until_ready(position_wise_ffn(x, w1, b1, w2, b2))
    assert out.shape == (batch, seq, ffn_inputs)
    assert jnp.allclose(out, ref, atol=1e-5, rtol=1e-5), "resident path mismatch"

    # Path 2: force the hidden-dim-tiled fallback (accumulator + pl.when) by
    # pretending the VMEM budget is tiny; exercises the reduction path too.
    out2 = jax.block_until_ready(
        position_wise_ffn(x, w1, b1, w2, b2, vmem_budget_bytes=1 << 20))
    assert jnp.allclose(out2, ref, atol=1e-5, rtol=1e-5), "k-tiled path mismatch"

    print("KERNEL_OK")
</pallas_src>

<mosaic_0001>
module attributes {stable_mosaic.version = 11 : i64} {
  func.func @_ffn_kernel_resident(%arg0: i32, %arg1: memref<64x128xf32, #tpu.memory_space<vmem>>, %arg2: memref<128x512xf32, #tpu.memory_space<vmem>>, %arg3: memref<1x512xf32, #tpu.memory_space<vmem>>, %arg4: memref<512x128xf32, #tpu.memory_space<vmem>>, %arg5: memref<1x128xf32, #tpu.memory_space<vmem>>, %arg6: memref<64x128xf32, #tpu.memory_space<vmem>>) attributes {dimension_semantics = [#tpu.dimension_semantics<parallel>], iteration_bounds = array<i64: 2>, scalar_prefetch = 0 : i64, scratch_operands = 0 : i64, tpu.core_type = #tpu.core_type<tc>, window_params = [{transform_indices = @transform_0, window_bounds = array<i64: 64, 128>}, {pipeline_mode = #tpu.pipeline_mode<synchronous>, transform_indices = @transform_1, window_bounds = array<i64: 128, 512>}, {pipeline_mode = #tpu.pipeline_mode<synchronous>, transform_indices = @transform_2, window_bounds = array<i64: 1, 512>}, {pipeline_mode = #tpu.pipeline_mode<synchronous>, transform_indices = @transform_3, window_bounds = array<i64: 512, 128>}, {pipeline_mode = #tpu.pipeline_mode<synchronous>, transform_indices = @transform_4, window_bounds = array<i64: 1, 128>}, {transform_indices = @transform_5, window_bounds = array<i64: 64, 128>}]} {
    %c0 = arith.constant 0 : index
    %c0_0 = arith.constant 0 : index
    %0 = vector.load %arg1[%c0, %c0_0] : memref<64x128xf32, #tpu.memory_space<vmem>>, vector<64x128xf32>
    %c0_1 = arith.constant 0 : index
    %c0_2 = arith.constant 0 : index
    %1 = vector.load %arg2[%c0_1, %c0_2] : memref<128x512xf32, #tpu.memory_space<vmem>>, vector<128x512xf32>
    %cst = arith.constant dense<0.000000e+00> : vector<64x512xf32>
    %2 = tpu.matmul %0, %1, %cst {dimension_numbers = #tpu.dot_dimension_numbers<[1], [0], [0], [1], [0, 0, 1, 1], [], []>} : vector<64x128xf32>, vector<128x512xf32>, vector<64x512xf32> -> vector<64x512xf32>
    %c0_3 = arith.constant 0 : index
    %c0_4 = arith.constant 0 : index
    %3 = vector.load %arg3[%c0_3, %c0_4] : memref<1x512xf32, #tpu.memory_space<vmem>>, vector<1x512xf32>
    %4 = vector.broadcast %3 : vector<1x512xf32> to vector<64x512xf32>
    %5 = arith.addf %2, %4 : vector<64x512xf32>
    %cst_5 = arith.constant 5.000000e-01 : f32
    %6 = vector.broadcast %cst_5 : f32 to vector<64x512xf32>
    %7 = arith.mulf %6, %5 : vector<64x512xf32>
    %cst_6 = arith.constant 0.707106769 : f32
    %8 = vector.broadcast %cst_6 : f32 to vector<64x512xf32>
    %9 = arith.mulf %5, %8 : vector<64x512xf32>
    %10 = math.erf %9 : vector<64x512xf32>
    %cst_7 = arith.constant 1.000000e+00 : f32
    %11 = vector.broadcast %cst_7 : f32 to vector<64x512xf32>
    %12 = arith.addf %11, %10 : vector<64x512xf32>
    %13 = arith.mulf %7, %12 : vector<64x512xf32>
    %c0_8 = arith.constant 0 : index
    %c0_9 = arith.constant 0 : index
    %14 = vector.load %arg4[%c0_8, %c0_9] : memref<512x128xf32, #tpu.memory_space<vmem>>, vector<512x128xf32>
    %cst_10 = arith.constant dense<0.000000e+00> : vector<64x128xf32>
    %15 = tpu.matmul %13, %14, %cst_10 {dimension_numbers = #tpu.dot_dimension_numbers<[1], [0], [0], [1], [0, 0, 1, 1], [], []>} : vector<64x512xf32>, vector<512x128xf32>, vector<64x128xf32> -> vector<64x128xf32>
    %c0_11 = arith.constant 0 : index
    %c0_12 = arith.constant 0 : index
    %16 = vector.load %arg5[%c0_11, %c0_12] : memref<1x128xf32, #tpu.memory_space<vmem>>, vector<1x128xf32>
    %17 = vector.broadcast %16 : vector<1x128xf32> to vector<64x128xf32>
    %18 = arith.addf %15, %17 : vector<64x128xf32>
    %c0_13 = arith.constant 0 : index
    %c0_14 = arith.constant 0 : index
    %19 = vector.load %arg6[%c0_13, %c0_14] : memref<64x128xf32, #tpu.memory_space<vmem>>, vector<64x128xf32>
    tpu.vector_store %arg6[%c0_13, %c0_14], %18 {strides = array<i32>} : memref<64x128xf32, #tpu.memory_space<vmem>>, vector<64x128xf32>,
    return
  }
  func.func @transform_0(%arg0: i32) -> (i32, i32) {
    %c0_i32 = arith.constant 0 : i32
    %c0_i32_0 = arith.constant 0 : i32
    return %arg0, %c0_i32 : i32, i32
  }
  func.func @transform_1(%arg0: i32) -> (i32, i32) {
    %c0_i32 = arith.constant 0 : i32
    %c0_i32_0 = arith.constant 0 : i32
    %c0_i32_1 = arith.constant 0 : i32
    return %c0_i32, %c0_i32_0 : i32, i32
  }
  func.func @transform_2(%arg0: i32) -> (i32, i32) {
    %c0_i32 = arith.constant 0 : i32
    %c0_i32_0 = arith.constant 0 : i32
    %c0_i32_1 = arith.constant 0 : i32
    return %c0_i32, %c0_i32_0 : i32, i32
  }
  func.func @transform_3(%arg0: i32) -> (i32, i32) {
    %c0_i32 = arith.constant 0 : i32
    %c0_i32_0 = arith.constant 0 : i32
    %c0_i32_1 = arith.constant 0 : i32
    return %c0_i32, %c0_i32_0 : i32, i32
  }
  func.func @transform_4(%arg0: i32) -> (i32, i32) {
    %c0_i32 = arith.constant 0 : i32
    %c0_i32_0 = arith.constant 0 : i32
    %c0_i32_1 = arith.constant 0 : i32
    return %c0_i32, %c0_i32_0 : i32, i32
  }
  func.func @transform_5(%arg0: i32) -> (i32, i32) {
    %c0_i32 = arith.constant 0 : i32
    %c0_i32_0 = arith.constant 0 : i32
    return %arg0, %c0_i32 : i32, i32
  }
}

</mosaic_0001>

<llo_original>
// kernel: position_wise_ffn.1
$region0: #{position_wise_ffn.1}
  #allocation0 [shape = 'u32[]', space=smem, size = 0x4, offset = 0x4, fixed_abs, tag = 'smem constant byte address 0x4 - core index']
  #allocation1 [shape = 'u32[72,128]{1,0:T(1,128)}', space=vmem, size = 0x9000, scoped, tag = 'internal scratch']
  %s0 = inlined_call_operand.hbm [shape: f32[128,128], index: 0, kind: input, shape index: {}]
  %s1 = inlined_call_operand.hbm [shape: f32[128,512], index: 1, kind: input, shape index: {}]
  %s2 = inlined_call_operand.vmem [shape: f32[1,512], index: 2, kind: input, shape index: {}]
  %s3 = inlined_call_operand.hbm [shape: f32[512,128], index: 3, kind: input, shape index: {}]
  %s4 = inlined_call_operand.vmem [shape: f32[1,128], index: 4, kind: input, shape index: {}]
  %s5 = inlined_call_operand.hbm [shape: f32[128,128], index: 5, kind: output, shape index: {}]
  %s6 = sld [smem:[#allocation0]]
  $region65: #{position_wise_ffn.1} parent=0
    _
  %s8 = ssub.s32 1, %s6
  %s9 = scalar_select 0, %s8, %s6
  $region1: #{position_wise_ffn.1} parent=0
    #allocation2 [shape = 'u8[65536]{0}', space=vmem, size = 0x10000, scoped, tag = 'input window, operand 0']
    #allocation3 [shape = 's32[2]{0}', space=sflag, size = 0x8, scoped, tag = 'scoped memory for position_wise_ffn.1']
    #allocation4 [shape = 's32[2]{0}', space=sflag, size = 0x8, scoped, tag = 'scoped memory for position_wise_ffn.1']
    #allocation5 [shape = 'u8[262144]{0}', space=vmem, size = 0x40000, scoped, tag = 'input window, operand 1, single buffered']
    #allocation6 [shape = 's32[1]{0}', space=sflag, size = 0x4, scoped, tag = 'scoped memory for position_wise_ffn.1']
    #allocation7 [shape = 'u8[262144]{0}', space=vmem, size = 0x40000, scoped, tag = 'input window, operand 3, single buffered']
    #allocation8 [shape = 'u8[65536]{0}', space=vmem, size = 0x10000, scoped, tag = 'output window, operand 0']
    %10 = vsyncpa [#allocation3], 0
    %s11 = scalar_lea.sflag [#allocation3], 1
    %12 = vsyncpa %s11, 0
    %13 = vsyncpa [#allocation6], 0
    %14 = vsyncpa [#allocation4], 0
    %s15 = scalar_lea.sflag [#allocation4], 1
    %16 = vsyncpa %s15, 0
    loop: start=0, step=1, limit=4
    $region2: #{position_wise_ffn.1} parent=1 // loop_pre_header
      _
    $region3: #{position_wise_ffn.1} parent=1 // loop_header
      %s18 = sphi 0, %s22
      %p19 = scmp.ge.s32.totalorder %s18, 4
      %s28 = sphi 0, %s30
      %s31 = sphi 0, %s28
      %s32 = sphi 0, %s31
      %s48 = sphi 0, %s32
      %s52 = sphi 0, %s52
      %s54 = sphi 0, %s52
      %s55 = sphi 0, %s54
      %s69 = sphi 0, %s55
      %s73 = sphi 0, %s73
      %s75 = sphi 0, %s73
      %s76 = sphi 0, %s75
      %s90 = sphi 0, %s76
      %s94 = sphi 0, %s94
      %s96 = sphi 0, %s94
      %s97 = sphi 0, %s96
      %s111 = sphi 0, %s97
      %s115 = sphi 0, %s115
      %s117 = sphi 0, %s115
      %s118 = sphi 0, %s117
      %s132 = sphi 0, %s118
      %s138 = sphi 0, %s140
      %s141 = sphi 0, %s138
      %s142 = sphi 0, %s141
      %s158 = sphi 0, %s142
    $region4: #{position_wise_ffn.1} parent=1 // loop_header_branch
      %21 = sbr.rel (%p19) target = $region8
    $region5: #{position_wise_ffn.1} parent=1 // loop_body
      %s23 = ssub.s32 %s18, 1
      %s24 = ssub.s32 %s18, 2
      %s25 = sadd.s32 %s18, 1
      %s26 = ssub.s32 %s18, %s25
      %p27 = scmp.eq.s32.totalorder %s26, 0
      %s29 = sadd.s32 %s28, 1
      %s30 = scalar_select %p27, %s28, %s29
      %p33 = pneg %p27
      %p34 = scmp.eq.s32.totalorder %s18, 1
      %p35 = por %p33, %p34
      %p36 = scmp.ne.s32.totalorder %s28, %s31
      %p37 = scmp.eq.s32.totalorder %s18, 0
      %p38 = por %p36, %p37
      %p39 = scmp.ne.s32.totalorder %s28, %s31
      %p40 = scmp.eq.s32.totalorder %s23, 1
      %p41 = por %p39, %p40
      %p42 = scmp.ne.s32.totalorder %s31, %s32
      %p43 = scmp.eq.s32.totalorder %s23, 0
      %p44 = por %p42, %p43
      %p45 = scmp.ne.s32.totalorder %s31, %s32
      %p46 = scmp.eq.s32.totalorder %s24, 1
      %p47 = por %p45, %p46
      %p49 = scmp.ne.s32.totalorder %s32, %s48
      %p50 = scmp.eq.s32.totalorder %s24, 0
      %p51 = por %p49, %p50
      %s53 = sadd.s32 %s52, 1
      %p56 = scmp.eq.s32.totalorder %s18, 1
      %p57 = scmp.ne.s32.totalorder %s52, %s54
      %p58 = scmp.eq.s32.totalorder %s18, 0
      %p59 = por %p57, %p58
      %p60 = scmp.ne.s32.totalorder %s52, %s54
      %p61 = scmp.eq.s32.totalorder %s23, 1
      %p62 = por %p60, %p61
      %p63 = scmp.ne.s32.totalorder %s54, %s55
      %p64 = scmp.eq.s32.totalorder %s23, 0
      %p65 = por %p63, %p64
      %p66 = scmp.ne.s32.totalorder %s54, %s55
      %p67 = scmp.eq.s32.totalorder %s24, 1
      %p68 = por %p66, %p67
      %p70 = scmp.ne.s32.totalorder %s55, %s69
      %p71 = scmp.eq.s32.totalorder %s24, 0
      %p72 = por %p70, %p71
      %s74 = sadd.s32 %s73, 1
      %p77 = scmp.eq.s32.totalorder %s18, 1
      %p78 = scmp.ne.s32.totalorder %s73, %s75
      %p79 = scmp.eq.s32.totalorder %s18, 0
      %p80 = por %p78, %p79
      %p81 = scmp.ne.s32.totalorder %s73, %s75
      %p82 = scmp.eq.s32.totalorder %s23, 1
      %p83 = por %p81, %p82
      %p84 = scmp.ne.s32.totalorder %s75, %s76
      %p85 = scmp.eq.s32.totalorder %s23, 0
      %p86 = por %p84, %p85
      %p87 = scmp.ne.s32.totalorder %s75, %s76
      %p88 = scmp.eq.s32.totalorder %s24, 1
      %p89 = por %p87, %p88
      %p91 = scmp.ne.s32.totalorder %s76, %s90
      %p92 = scmp.eq.s32.totalorder %s24, 0
      %p93 = por %p91, %p92
      %s95 = sadd.s32 %s94, 1
      %p98 = scmp.eq.s32.totalorder %s18, 1
      %p99 = scmp.ne.s32.totalorder %s94, %s96
      %p100 = scmp.eq.s32.totalorder %s18, 0
      %p101 = por %p99, %p100
      %p102 = scmp.ne.s32.totalorder %s94, %s96
      %p103 = scmp.eq.s32.totalorder %s23, 1
      %p104 = por %p102, %p103
      %p105 = scmp.ne.s32.totalorder %s96, %s97
      %p106 = scmp.eq.s32.totalorder %s23, 0
      %p107 = por %p105, %p106
      %p108 = scmp.ne.s32.totalorder %s96, %s97
      %p109 = scmp.eq.s32.totalorder %s24, 1
      %p110 = por %p108, %p109
      %p112 = scmp.ne.s32.totalorder %s97, %s111
      %p113 = scmp.eq.s32.totalorder %s24, 0
      %p114 = por %p112, %p113
      %s116 = sadd.s32 %s115, 1
      %p119 = scmp.eq.s32.totalorder %s18, 1
      %p120 = scmp.ne.s32.totalorder %s115, %s117
      %p121 = scmp.eq.s32.totalorder %s18, 0
      %p122 = por %p120, %p121
      %p123 = scmp.ne.s32.totalorder %s115, %s117
      %p124 = scmp.eq.s32.totalorder %s23, 1
      %p125 = por %p123, %p124
      %p126 = scmp.ne.s32.totalorder %s117, %s118
      %p127 = scmp.eq.s32.totalorder %s23, 0
      %p128 = por %p126, %p127
      %p129 = scmp.ne.s32.totalorder %s117, %s118
      %p130 = scmp.eq.s32.totalorder %s24, 1
      %p131 = por %p129, %p130
      %p133 = scmp.ne.s32.totalorder %s118, %s132
      %p134 = scmp.eq.s32.totalorder %s24, 0
      %p135 = por %p133, %p134
      %s136 = ssub.s32 %s18, %s25
      %p137 = scmp.eq.s32.totalorder %s136, 0
      %s139 = sadd.s32 %s138, 1
      %s140 = scalar_select %p137, %s138, %s139
      %p143 = pneg %p137
      %p144 = scmp.eq.s32.totalorder %s18, 1
      %p145 = por %p143, %p144
      %p146 = scmp.ne.s32.totalorder %s138, %s141
      %p147 = scmp.eq.s32.totalorder %s18, 0
      %p148 = por %p146, %p147
      %p149 = scmp.ne.s32.totalorder %s138, %s141
      %p150 = scmp.eq.s32.totalorder %s23, 1
      %p151 = por %p149, %p150
      %p152 = scmp.ne.s32.totalorder %s141, %s142
      %p153 = scmp.eq.s32.totalorder %s23, 0
      %p154 = por %p152, %p153
      %p155 = scmp.ne.s32.totalorder %s141, %s142
      %p156 = scmp.eq.s32.totalorder %s24, 1
      %p157 = por %p155, %p156
      %p159 = scmp.ne.s32.totalorder %s142, %s158
      %p160 = scmp.eq.s32.totalorder %s24, 0
      %p161 = por %p159, %p160
      %p162 = scmp.le.s32.totalorder 1, %s18
      %p163 = scmp.lt.s32.totalorder %s18, 3
      %p164 = pnand %p162, %p163
      %p165 = pneg %p164
      // Predicated region
      $region9: #{position_wise_ffn.1} parent=5 // pred_check
        _
      $region10: #{position_wise_ffn.1} parent=5 // pred_check_branch
        %167 = sbr.rel (%p164) target = $region12
      $region11: #{position_wise_ffn.1} parent=5 // pred_region
        %s168 = ssub.s32 %s18, 1
        // Predicated region
        $region13: #{position_wise_ffn.1} parent=11 // pred_check
          %p169 = pneg %p65
        $region14: #{position_wise_ffn.1} parent=11 // pred_check_branch
          %171 = sbr.rel (%p169) target = $region16
        $region15: #{position_wise_ffn.1} parent=11 // pred_region
          %173 = vsyncadd [#allocation6], 0
          %s174 = sshll.u32 %s1, 4
          %s175 = int_to_ptr.hbm [resolvable:$true] %s174
          %s176 = sshll.u32 [#allocation5], 4
          %s177 = int_to_ptr.vmem [resolvable:$true] %s176
          %182 = dma.hbm_to_vmem [thread:$0]  %s175, 8192, %s177, [#allocation6], 512, 512, 32
        $region16: #{position_wise_ffn.1} parent=11 // pred_fallthru
          _
        // Predicated region
        $region17: #{position_wise_ffn.1} parent=11 // pred_check
          %p183 = pneg %p86
        $region18: #{position_wise_ffn.1} parent=11 // pred_check_branch
          %185 = sbr.rel (%p183) target = $region20
        $region19: #{position_wise_ffn.1} parent=11 // pred_region
          _
        $region20: #{position_wise_ffn.1} parent=11 // pred_fallthru
          _
        // Predicated region
        $region21: #{position_wise_ffn.1} parent=11 // pred_check
          %p186 = pneg %p107
        $region22: #{position_wise_ffn.1} parent=11 // pred_check_branch
          %188 = sbr.rel (%p186) target = $region24
        $region23: #{position_wise_ffn.1} parent=11 // pred_region
          %190 = vsyncadd [#allocation6], 0
          %s191 = sshll.u32 %s3, 4
          %s192 = int_to_ptr.hbm [resolvable:$true] %s191
          %s193 = sshll.u32 [#allocation7], 4
          %s194 = int_to_ptr.vmem [resolvable:$true] %s193
          %199 = dma.hbm_to_vmem [thread:$0]  %s192, 8192, %s194, [#allocation6], 128, 128, 8
        $region24: #{position_wise_ffn.1} parent=11 // pred_fallthru
          _
        // Predicated region
        $region25: #{position_wise_ffn.1} parent=11 // pred_check
          %p200 = pneg %p128
        $region26: #{position_wise_ffn.1} parent=11 // pred_check_branch
          %202 = sbr.rel (%p200) target = $region28
        $region27: #{position_wise_ffn.1} parent=11 // pred_region
          _
        $region28: #{position_wise_ffn.1} parent=11 // pred_fallthru
          _
      $region12: #{position_wise_ffn.1} parent=5 // pred_fallthru
        _
      %p203 = scmp.lt.s32.totalorder %s18, 2
      // Predicated region
      $region29: #{position_wise_ffn.1} parent=5 // pred_check
        %p204 = pneg %p203
      $region30: #{position_wise_ffn.1} parent=5 // pred_check_branch
        %206 = sbr.rel (%p204) target = $region32
      $region31: #{position_wise_ffn.1} parent=5 // pred_region
        // Predicated region
        $region33: #{position_wise_ffn.1} parent=31 // pred_check
          %p207 = pneg %p38
        $region34: #{position_wise_ffn.1} parent=31 // pred_check_branch
          %209 = sbr.rel (%p207) target = $region36
        $region35: #{position_wise_ffn.1} parent=31 // pred_region
          %s210 = sand.u32 %s28, 1
          %s211 = scalar_lea.sflag [#allocation3], %s210
          %s212 = sand.u32 %s28, 1
          %s213 = smul.addr %s212, 64
          %s214 = scalar_lea.vmem [#allocation2], %s213
          %s215 = smul.u32 8, %s18
          %217 = vsyncadd %s211, 0
          %s218 = smul.addr %s215, 8
          %s219 = scalar_lea.hbm %s0, %s218
          %s220 = sshll.u32 %s219, 4
          %s221 = int_to_ptr.hbm [resolvable:$true] %s220
          %s222 = sshll.u32 %s214, 4
          %s223 = int_to_ptr.vmem [resolvable:$true] %s222
          %228 = dma.hbm_to_vmem [thread:$0]  %s221, 1024, %s223, %s211, 128, 128, 8
        $region36: #{position_wise_ffn.1} parent=31 // pred_fallthru
          _
      $region32: #{position_wise_ffn.1} parent=5 // pred_fallthru
        _
      %p229 = scmp.le.s32.totalorder 1, %s18
      %p230 = scmp.lt.s32.totalorder %s18, 3
      %p231 = pnand %p229, %p230
      %p232 = pneg %p231
      // Predicated region
      $region37: #{position_wise_ffn.1} parent=5 // pred_check
        _
      $region38: #{position_wise_ffn.1} parent=5 // pred_check_branch
        %234 = sbr.rel (%p231) target = $region40
      $region39: #{position_wise_ffn.1} parent=5 // pred_region
        %s235 = ssub.s32 %s18, 1
        %s236 = sand.u32 %s31, 1
        %s237 = scalar_lea.sflag [#allocation3], %s236
        %s238 = sand.u32 %s31, 1
        %s239 = smul.addr %s238, 64
        %s240 = scalar_lea.vmem [#allocation2], %s239
        // Predicated region
        $region41: #{position_wise_ffn.1} parent=39 // pred_check
          %p241 = pneg %p44
        $region42: #{position_wise_ffn.1} parent=39 // pred_check_branch
          %243 = sbr.rel (%p241) target = $region44
        $region43: #{position_wise_ffn.1} parent=39 // pred_region
          %245 = dma.done %s237, 1024
        $region44: #{position_wise_ffn.1} parent=39 // pred_fallthru
          _
        // Predicated region
        $region45: #{position_wise_ffn.1} parent=39 // pred_check
          %p246 = pneg %p65
        $region46: #{position_wise_ffn.1} parent=39 // pred_check_branch
          %248 = sbr.rel (%p246) target = $region48
        $region47: #{position_wise_ffn.1} parent=39 // pred_region
          %250 = dma.done [#allocation6], 8192
        $region48: #{position_wise_ffn.1} parent=39 // pred_fallthru
          _
        // Predicated region
        $region49: #{position_wise_ffn.1} parent=39 // pred_check
          %p251 = pneg %p107
        $region50: #{position_wise_ffn.1} parent=39 // pred_check_branch
          %253 = sbr.rel (%p251) target = $region52
        $region51: #{position_wise_ffn.1} parent=39 // pred_region
          %255 = dma.done [#allocation6], 8192
        $region52: #{position_wise_ffn.1} parent=39 // pred_fallthru
          _
        %s256 = sand.u32 %s31, 1
        %s257 = scalar_lea.sflag [#allocation3], %s256
        %s258 = sand.u32 %s31, 1
        %s259 = smul.addr %s258, 64
        %s260 = scalar_lea.vmem [#allocation2], %s259
        %p261 = pneg %p44
        %p262 = pneg %p41
        %p263 = pneg %p65
        %p264 = pneg %p62
        %p265 = pneg %p86
        %p266 = pneg %p83
        %p267 = pneg %p107
        %p268 = pneg %p104
        %p269 = pneg %p128
        %p270 = pneg %p125
        %p271 = pneg %p154
        %p272 = pneg %p151
        %s273 = sand.u32 %s141, 1
        %s274 = scalar_lea.sflag [#allocation4], %s273
        %s275 = sand.u32 %s141, 1
        %s276 = smul.addr %s275, 64
        %s277 = scalar_lea.vmem [#allocation8], %s276
        %s278 = smul.u32 8, %s23
        %s279 = smul.u32 8, %s23
        %v280 = vld [vmem:[%s240] sm:$0xff]
        %v281 = vld [vmem:[%s240 + $0x8] sm:$0xff]
        %v282 = vld [vmem:[%s240 + $0x10] sm:$0xff]
        %v283 = vld [vmem:[%s240 + $0x18] sm:$0xff]
        %v284 = vld [vmem:[%s240 + $0x20] sm:$0xff]
        %v285 = vld [vmem:[%s240 + $0x28] sm:$0xff]
        %v286 = vld [vmem:[%s240 + $0x30] sm:$0xff]
        %v287 = vld [vmem:[%s240 + $0x38] sm:$0xff]
        %v288 = vld [vmem:[#allocation5] sm:$0xff]
        %v289 = vld [vmem:[#allocation5 + $0x8] sm:$0xff]
        %v290 = vld [vmem:[#allocation5 + $0x10] sm:$0xff]
        %v291 = vld [vmem:[#allocation5 + $0x18] sm:$0xff]
        %v292 = vld [vmem:[#allocation5 + $0x20] sm:$0xff]
        %v293 = vld [vmem:[#allocation5 + $0x28] sm:$0xff]
        %v294 = vld [vmem:[#allocation5 + $0x30] sm:$0xff]
        %v295 = vld [vmem:[#allocation5 + $0x38] sm:$0xff]
        %v296 = vld [vmem:[#allocation5 + $0x40] sm:$0xff]
        %v297 = vld [vmem:[#allocation5 + $0x48] sm:$0xff]
        %v298 = vld [vmem:[#allocation5 + $0x50] sm:$0xff]
        %v299 = vld [vmem:[#allocation5 + $0x58] sm:$0xff]
        %v300 = vld [vmem:[#allocation5 + $0x60] sm:$0xff]
        %v301 = vld [vmem:[#allocation5 + $0x68] sm:$0xff]
        %v302 = vld [vmem:[#allocation5 + $0x70] sm:$0xff]
        %v303 = vld [vmem:[#allocation5 + $0x78] sm:$0xff]
        %v304 = vld [vmem:[#allocation5 + $0x80] sm:$0xff]
        %v305 = vld [vmem:[#allocation5 + $0x88] sm:$0xff]
        %v306 = vld [vmem:[#allocation5 + $0x90] sm:$0xff]
        %v307 = vld [vmem:[#allocation5 + $0x98] sm:$0xff]
        %v308 = vld [vmem:[#allocation5 + $0xa0] sm:$0xff]
        %v309 = vld [vmem:[#allocation5 + $0xa8] sm:$0xff]
        %v310 = vld [vmem:[#allocation5 + $0xb0] sm:$0xff]
        %v311 = vld [vmem:[#allocation5 + $0xb8] sm:$0xff]
        %v312 = vld [vmem:[#allocation5 + $0xc0] sm:$0xff]
        %v313 = vld [vmem:[#allocation5 + $0xc8] sm:$0xff]
        %v314 = vld [vmem:[#allocation5 + $0xd0] sm:$0xff]
        %v315 = vld [vmem:[#allocation5 + $0xd8] sm:$0xff]
        %v316 = vld [vmem:[#allocation5 + $0xe0] sm:$0xff]
        %v317 = vld [vmem:[#allocation5 + $0xe8] sm:$0xff]
        %v318 = vld [vmem:[#allocation5 + $0xf0] sm:$0xff]
        %v319 = vld [vmem:[#allocation5 + $0xf8] sm:$0xff]
        %v320 = vld [vmem:[#allocation5 + $0x100] sm:$0xff]
        %v321 = vld [vmem:[#allocation5 + $0x108] sm:$0xff]
        %v322 = vld [vmem:[#allocation5 + $0x110] sm:$0xff]
        %v323 = vld [vmem:[#allocation5 + $0x118] sm:$0xff]
        %v324 = vld [vmem:[#allocation5 + $0x120] sm:$0xff]
        %v325 = vld [vmem:[#allocation5 + $0x128] sm:$0xff]
        %v326 = vld [vmem:[#allocation5 + $0x130] sm:$0xff]
        %v327 = vld [vmem:[#allocation5 + $0x138] sm:$0xff]
        %v328 = vld [vmem:[#allocation5 + $0x140] sm:$0xff]
        %v329 = vld [vmem:[#allocation5 + $0x148] sm:$0xff]
        %v330 = vld [vmem:[#allocation5 + $0x150] sm:$0xff]
        %v331 = vld [vmem:[#allocation5 + $0x158] sm:$0xff]
        %v332 = vld [vmem:[#allocation5 + $0x160] sm:$0xff]
        %v333 = vld [vmem:[#allocation5 + $0x168] sm:$0xff]
        %v334 = vld [vmem:[#allocation5 + $0x170] sm:$0xff]
        %v335 = vld [vmem:[#allocation5 + $0x178] sm:$0xff]
        %v336 = vld [vmem:[#allocation5 + $0x180] sm:$0xff]
        %v337 = vld [vmem:[#allocation5 + $0x188] sm:$0xff]
        %v338 = vld [vmem:[#allocation5 + $0x190] sm:$0xff]
        %v339 = vld [vmem:[#allocation5 + $0x198] sm:$0xff]
        %v340 = vld [vmem:[#allocation5 + $0x1a0] sm:$0xff]
        %v341 = vld [vmem:[#allocation5 + $0x1a8] sm:$0xff]
        %v342 = vld [vmem:[#allocation5 + $0x1b0] sm:$0xff]
        %v343 = vld [vmem:[#allocation5 + $0x1b8] sm:$0xff]
        %v344 = vld [vmem:[#allocation5 + $0x1c0] sm:$0xff]
        %v345 = vld [vmem:[#allocation5 + $0x1c8] sm:$0xff]
        %v346 = vld [vmem:[#allocation5 + $0x1d0] sm:$0xff]
        %v347 = vld [vmem:[#allocation5 + $0x1d8] sm:$0xff]
        %v348 = vld [vmem:[#allocation5 + $0x1e0] sm:$0xff]
        %v349 = vld [vmem:[#allocation5 + $0x1e8] sm:$0xff]
        %v350 = vld [vmem:[#allocation5 + $0x1f0] sm:$0xff]
        %v351 = vld [vmem:[#allocation5 + $0x1f8] sm:$0xff]
        %v352 = vld [vmem:[%s2] sm:$0xf]
        %v354 = vperm.slane %v352, 0
        %v355 = vperm.slane %v352, 1
        %v356 = vperm.slane %v352, 2
        %v357 = vperm.slane %v352, 3
        %362 = vmatpush.msra.mxu0 %v348
        %363 = vmatpush.msra.mxu0 %v344
        %364 = vmatpush.msra.mxu0 %v340
        %365 = vmatpush.msra.mxu0 %v336
        %366 = vmatpush.msra.mxu0 %v332
        %367 = vmatpush.msra.mxu0 %v328
        %368 = vmatpush.msra.mxu0 %v324
        %369 = vmatpush.msra.mxu0 %v320
        %370 = vmatpush.msra.mxu0 %v316
        %371 = vmatpush.msra.mxu0 %v312
        %372 = vmatpush.msra.mxu0 %v308
        %373 = vmatpush.msra.mxu0 %v304
        %374 = vmatpush.msra.mxu0 %v300
        %375 = vmatpush.msra.mxu0 %v296
        %376 = vmatpush.msra.mxu0 %v292
        %377 = vmatpush.msra.mxu0 %v288
        %378 = vmatmul.f32.gmra.mxu0 %v280
        %v379 = vpop.f32.mrf.mxu0
        %v380 = vadd.f32 %v354, %v379
        %381 = vmatmul.f32.gmra.mxu0 %v281
        %v382 = vpop.f32.mrf.mxu0
        %v383 = vadd.f32 %v354, %v382
        %384 = vmatmul.f32.gmra.mxu0 %v282
        %v385 = vpop.f32.mrf.mxu0
        %v386 = vadd.f32 %v354, %v385
        %387 = vmatmul.f32.gmra.mxu0 %v283
        %v388 = vpop.f32.mrf.mxu0
        %v389 = vadd.f32 %v354, %v388
        %390 = vmatmul.f32.gmra.mxu0 %v284
        %v391 = vpop.f32.mrf.mxu0
        %v392 = vadd.f32 %v354, %v391
        %393 = vmatmul.f32.gmra.mxu0 %v285
        %v394 = vpop.f32.mrf.mxu0
        %v395 = vadd.f32 %v354, %v394
        %396 = vmatmul.f32.gmra.mxu0 %v286
        %v397 = vpop.f32.mrf.mxu0
        %v398 = vadd.f32 %v354, %v397
        %399 = vmatmul.f32.gmra.mxu0 %v287
        %v400 = vpop.f32.mrf.mxu0
        %v401 = vadd.f32 %v354, %v400
        %402 = vdwg.mxu0
        %403 = vmatpush.msra.mxu0 %v349
        %404 = vmatpush.msra.mxu0 %v345
        %405 = vmatpush.msra.mxu0 %v341
        %406 = vmatpush.msra.mxu0 %v337
        %407 = vmatpush.msra.mxu0 %v333
        %408 = vmatpush.msra.mxu0 %v329
        %409 = vmatpush.msra.mxu0 %v325
        %410 = vmatpush.msra.mxu0 %v321
        %411 = vmatpush.msra.mxu0 %v317
        %412 = vmatpush.msra.mxu0 %v313
        %413 = vmatpush.msra.mxu0 %v309
        %414 = vmatpush.msra.mxu0 %v305
        %415 = vmatpush.msra.mxu0 %v301
        %416 = vmatpush.msra.mxu0 %v297
        %417 = vmatpush.msra.mxu0 %v293
        %418 = vmatpush.msra.mxu0 %v289
        %419 = vmatmul.f32.gmra.mxu0 %v280
        %v420 = vpop.f32.mrf.mxu0
        %v421 = vadd.f32 %v355, %v420
        %422 = vmatmul.f32.gmra.mxu0 %v281
        %v423 = vpop.f32.mrf.mxu0
        %v424 = vadd.f32 %v355, %v423
        %425 = vmatmul.f32.gmra.mxu0 %v282
        %v426 = vpop.f32.mrf.mxu0
        %v427 = vadd.f32 %v355, %v426
        %428 = vmatmul.f32.gmra.mxu0 %v283
        %v429 = vpop.f32.mrf.mxu0
        %v430 = vadd.f32 %v355, %v429
        %431 = vmatmul.f32.gmra.mxu0 %v284
        %v432 = vpop.f32.mrf.mxu0
        %v433 = vadd.f32 %v355, %v432
        %434 = vmatmul.f32.gmra.mxu0 %v285
        %v435 = vpop.f32.mrf.mxu0
        %v436 = vadd.f32 %v355, %v435
        %437 = vmatmul.f32.gmra.mxu0 %v286
        %v438 = vpop.f32.mrf.mxu0
        %v439 = vadd.f32 %v355, %v438
        %440 = vmatmul.f32.gmra.mxu0 %v287
        %v441 = vpop.f32.mrf.mxu0
        %v442 = vadd.f32 %v355, %v441
        %443 = vdwg.mxu0
        %444 = vmatpush.msra.mxu0 %v350
        %445 = vmatpush.msra.mxu0 %v346
        %446 = vmatpush.msra.mxu0 %v342
        %447 = vmatpush.msra.mxu0 %v338
        %448 = vmatpush.msra.mxu0 %v334
        %449 = vmatpush.msra.mxu0 %v330
        %450 = vmatpush.msra.mxu0 %v326
        %451 = vmatpush.msra.mxu0 %v322
        %452 = vmatpush.msra.mxu0 %v318
        %453 = vmatpush.msra.mxu0 %v314
        %454 = vmatpush.msra.mxu0 %v310
        %455 = vmatpush.msra.mxu0 %v306
        %456 = vmatpush.msra.mxu0 %v302
        %457 = vmatpush.msra.mxu0 %v298
        %458 = vmatpush.msra.mxu0 %v294
        %459 = vmatpush.msra.mxu0 %v290
        %460 = vmatmul.f32.gmra.mxu0 %v280
        %v461 = vpop.f32.mrf.mxu0
        %v462 = vadd.f32 %v356, %v461
        %463 = vmatmul.f32.gmra.mxu0 %v281
        %v464 = vpop.f32.mrf.mxu0
        %v465 = vadd.f32 %v356, %v464
        %466 = vmatmul.f32.gmra.mxu0 %v282
        %v467 = vpop.f32.mrf.mxu0
        %v468 = vadd.f32 %v356, %v467
        %469 = vmatmul.f32.gmra.mxu0 %v283
        %v470 = vpop.f32.mrf.mxu0
        %v471 = vadd.f32 %v356, %v470
        %472 = vmatmul.f32.gmra.mxu0 %v284
        %v473 = vpop.f32.mrf.mxu0
        %v474 = vadd.f32 %v356, %v473
        %475 = vmatmul.f32.gmra.mxu0 %v285
        %v476 = vpop.f32.mrf.mxu0
        %v477 = vadd.f32 %v356, %v476
        %478 = vmatmul.f32.gmra.mxu0 %v286
        %v479 = vpop.f32.mrf.mxu0
        %v480 = vadd.f32 %v356, %v479
        %481 = vmatmul.f32.gmra.mxu0 %v287
        %v482 = vpop.f32.mrf.mxu0
        %v483 = vadd.f32 %v356, %v482
        %484 = vdwg.mxu0
        %485 = vmatpush.msra.mxu0 %v351
        %486 = vmatpush.msra.mxu0 %v347
        %487 = vmatpush.msra.mxu0 %v343
        %488 = vmatpush.msra.mxu0 %v339
        %489 = vmatpush.msra.mxu0 %v335
        %490 = vmatpush.msra.mxu0 %v331
        %491 = vmatpush.msra.mxu0 %v327
        %492 = vmatpush.msra.mxu0 %v323
        %493 = vmatpush.msra.mxu0 %v319
        %494 = vmatpush.msra.mxu0 %v315
        %495 = vmatpush.msra.mxu0 %v311
        %496 = vmatpush.msra.mxu0 %v307
        %497 = vmatpush.msra.mxu0 %v303
        %498 = vmatpush.msra.mxu0 %v299
        %499 = vmatpush.msra.mxu0 %v295
        %500 = vmatpush.msra.mxu0 %v291
        %501 = vmatmul.f32.gmra.mxu0 %v280
        %v502 = vpop.f32.mrf.mxu0
        %v503 = vadd.f32 %v357, %v502
        %504 = vmatmul.f32.gmra.mxu0 %v281
        %v505 = vpop.f32.mrf.mxu0
        %v506 = vadd.f32 %v357, %v505
        %507 = vmatmul.f32.gmra.mxu0 %v282
        %v508 = vpop.f32.mrf.mxu0
        %v509 = vadd.f32 %v357, %v508
        %510 = vmatmul.f32.gmra.mxu0 %v283
        %v511 = vpop.f32.mrf.mxu0
        %v512 = vadd.f32 %v357, %v511
        %513 = vmatmul.f32.gmra.mxu0 %v284
        %v514 = vpop.f32.mrf.mxu0
        %v515 = vadd.f32 %v357, %v514
        %516 = vmatmul.f32.gmra.mxu0 %v285
        %v517 = vpop.f32.mrf.mxu0
        %v518 = vadd.f32 %v357, %v517
        %519 = vmatmul.f32.gmra.mxu0 %v286
        %v520 = vpop.f32.mrf.mxu0
        %v521 = vadd.f32 %v357, %v520
        %522 = vmatmul.f32.gmra.mxu0 %v287
        %v523 = vpop.f32.mrf.mxu0
        %v524 = vadd.f32 %v357, %v523
        %525 = vdwg.mxu0
        %v526 = vmul.f32 %v380, 0.5
        %v527 = vmul.f32 %v421, 0.5
        %v528 = vmul.f32 %v462, 0.5
        %v529 = vmul.f32 %v503, 0.5
        %v530 = vmul.f32 %v383, 0.5
        %v531 = vmul.f32 %v424, 0.5
        %v532 = vmul.f32 %v465, 0.5
        %v533 = vmul.f32 %v506, 0.5
        %v534 = vmul.f32 %v386, 0.5
        %v535 = vmul.f32 %v427, 0.5
        %v536 = vmul.f32 %v468, 0.5
        %v537 = vmul.f32 %v509, 0.5
        %v538 = vmul.f32 %v389, 0.5
        %v539 = vmul.f32 %v430, 0.5
        %v540 = vmul.f32 %v471, 0.5
        %v541 = vmul.f32 %v512, 0.5
        %v542 = vmul.f32 %v392, 0.5
        %v543 = vmul.f32 %v433, 0.5
        %v544 = vmul.f32 %v474, 0.5
        %v545 = vmul.f32 %v515, 0.5
        %v546 = vmul.f32 %v395, 0.5
        %v547 = vmul.f32 %v436, 0.5
        %v548 = vmul.f32 %v477, 0.5
        %v549 = vmul.f32 %v518, 0.5
        %v550 = vmul.f32 %v398, 0.5
        %v551 = vmul.f32 %v439, 0.5
        %v552 = vmul.f32 %v480, 0.5
        %v553 = vmul.f32 %v521, 0.5
        %v554 = vmul.f32 %v401, 0.5
        %v555 = vmul.f32 %v442, 0.5
        %v556 = vmul.f32 %v483, 0.5
        %v557 = vmul.f32 %v524, 0.5
        %v558 = vmul.f32 %v380, 0.70710677
        %v559 = vmul.f32 %v421, 0.70710677
        %v560 = vmul.f32 %v462, 0.70710677
        %v561 = vmul.f32 %v503, 0.70710677
        %v562 = vmul.f32 %v383, 0.70710677
        %v563 = vmul.f32 %v424, 0.70710677
        %v564 = vmul.f32 %v465, 0.70710677
        %v565 = vmul.f32 %v506, 0.70710677
        %v566 = vmul.f32 %v386, 0.70710677
        %v567 = vmul.f32 %v427, 0.70710677
        %v568 = vmul.f32 %v468, 0.70710677
        %v569 = vmul.f32 %v509, 0.70710677
        %v570 = vmul.f32 %v389, 0.70710677
        %v571 = vmul.f32 %v430, 0.70710677
        %v572 = vmul.f32 %v471, 0.70710677
        %v573 = vmul.f32 %v512, 0.70710677
        %v574 = vmul.f32 %v392, 0.70710677
        %v575 = vmul.f32 %v433, 0.70710677
        %v576 = vmul.f32 %v474, 0.70710677
        %v577 = vmul.f32 %v515, 0.70710677
        %v578 = vmul.f32 %v395, 0.70710677
        %v579 = vmul.f32 %v436, 0.70710677
        %v580 = vmul.f32 %v477, 0.70710677
        %v581 = vmul.f32 %v518, 0.70710677
        %v582 = vmul.f32 %v398, 0.70710677
        %v583 = vmul.f32 %v439, 0.70710677
        %v584 = vmul.f32 %v480, 0.70710677
        %v585 = vmul.f32 %v521, 0.70710677
        %v586 = vmul.f32 %v401, 0.70710677
        %v587 = vmul.f32 %v442, 0.70710677
        %v588 = vmul.f32 %v483, 0.70710677
        %v589 = vmul.f32 %v524, 0.70710677
        %v590 = vmul.f32 %v558, %v558
        %v591 = vmin.f32 16.0, %v590
        %v592 = vmul.f32 %v591, 2.1237322e-06
        %v593 = vadd.f32 %v592, 0.00028619796
        %v594 = vmul.f32 %v591, %v593
        %v595 = vadd.f32 %v594, 0.0036580483
        %v596 = vmul.f32 %v591, %v595
        %v597 = vadd.f32 %v596, 0.05243302
        %v598 = vmul.f32 %v591, %v597
        %v599 = vadd.f32 %v598, 0.18741608
        %v600 = vmul.f32 %v591, %v599
        %v601 = vadd.f32 %v600, 1.1283791
        %v602 = vmul.f32 %v558, %v601
        %v603 = vmul.f32 %v591, 3.8918573e-05
        %v604 = vadd.f32 %v603, 0.001143296
        %v605 = vmul.f32 %v591, %v604
        %v606 = vadd.f32 %v605, 0.014752088
        %v607 = vmul.f32 %v591, %v606
        %v608 = vadd.f32 %v607, 0.112945676
        %v609 = vmul.f32 %v591, %v608
        %v610 = vadd.f32 %v609, 0.4994258
        %v611 = vmul.f32 %v591, %v610
        %v612 = vadd.f32 %v611, 1.0
        %v613 = vrcp.pop %v612
        %v614 = vmul.f32 %v612, %v613
        %v615 = vsub.f32 1.0, %v614
        %v616 = vmul.f32 %v613, %v615
        %v617 = vadd.f32 %v613, %v616
        %vm618 = vweird.f32 %v612
        %vm619 = vweird.f32 %v613
        %vm620 = vmor %vm618, %vm619
        %v621 = vsel %vm620, %v613, %v617
        %v622 = vand.u32 2147483647, %v612
        %vm623 = vcmp.eq.f32.partialorder %v622, 8.507059e+37
        %v624 = vand.u32 %v612, 2147483648
        %v625 = vor.u32 1.1754944e-38, %v624
        %v626 = vsel %vm623, %v625, %v621
        %v627 = vmul.f32 %v602, %v626
        %v628 = vmin.f32 %v627, 1.0
        %v629 = vmax.f32 %v628, -1.0
        %v630 = vmul.f32 %v559, %v559
        %v631 = vmin.f32 16.0, %v630
        %v632 = vmul.f32 %v631, 2.1237322e-06
        %v633 = vadd.f32 %v632, 0.00028619796
        %v634 = vmul.f32 %v631, %v633
        %v635 = vadd.f32 %v634, 0.0036580483
        %v636 = vmul.f32 %v631, %v635
        %v637 = vadd.f32 %v636, 0.05243302
        %v638 = vmul.f32 %v631, %v637
        %v639 = vadd.f32 %v638, 0.18741608
        %v640 = vmul.f32 %v631, %v639
        %v641 = vadd.f32 %v640, 1.1283791
        %v642 = vmul.f32 %v559, %v641
        %v643 = vmul.f32 %v631, 3.8918573e-05
        %v644 = vadd.f32 %v643, 0.001143296
        %v645 = vmul.f32 %v631, %v644
        %v646 = vadd.f32 %v645, 0.014752088
        %v647 = vmul.f32 %v631, %v646
        %v648 = vadd.f32 %v647, 0.112945676
        %v649 = vmul.f32 %v631, %v648
        %v650 = vadd.f32 %v649, 0.4994258
        %v651 = vmul.f32 %v631, %v650
        %v652 = vadd.f32 %v651, 1.0
        %v653 = vrcp.pop %v652
        %v654 = vmul.f32 %v652, %v653
        %v655 = vsub.f32 1.0, %v654
        %v656 = vmul.f32 %v653, %v655
        %v657 = vadd.f32 %v653, %v656
        %vm658 = vweird.f32 %v652
        %vm659 = vweird.f32 %v653
        %vm660 = vmor %vm658, %vm659
        %v661 = vsel %vm660, %v653, %v657
        %v662 = vand.u32 2147483647, %v652
        %vm663 = vcmp.eq.f32.partialorder %v662, 8.507059e+37
        %v664 = vand.u32 %v652, 2147483648
        %v665 = vor.u32 1.1754944e-38, %v664
        %v666 = vsel %vm663, %v665, %v661
        %v667 = vmul.f32 %v642, %v666
        %v668 = vmin.f32 %v667, 1.0
        %v669 = vmax.f32 %v668, -1.0
        %v670 = vmul.f32 %v560, %v560
        %v671 = vmin.f32 16.0, %v670
        %v672 = vmul.f32 %v671, 2.1237322e-06
        %v673 = vadd.f32 %v672, 0.00028619796
        %v674 = vmul.f32 %v671, %v673
        %v675 = vadd.f32 %v674, 0.0036580483
        %v676 = vmul.f32 %v671, %v675
        %v677 = vadd.f32 %v676, 0.05243302
        %v678 = vmul.f32 %v671, %v677
        %v679 = vadd.f32 %v678, 0.18741608
        %v680 = vmul.f32 %v671, %v679
        %v681 = vadd.f32 %v680, 1.1283791
        %v682 = vmul.f32 %v560, %v681
        %v683 = vmul.f32 %v671, 3.8918573e-05
        %v684 = vadd.f32 %v683, 0.001143296
        %v685 = vmul.f32 %v671, %v684
        %v686 = vadd.f32 %v685, 0.014752088
        %v687 = vmul.f32 %v671, %v686
        %v688 = vadd.f32 %v687, 0.112945676
        %v689 = vmul.f32 %v671, %v688
        %v690 = vadd.f32 %v689, 0.4994258
        %v691 = vmul.f32 %v671, %v690
        %v692 = vadd.f32 %v691, 1.0
        %v693 = vrcp.pop %v692
        %v694 = vmul.f32 %v692, %v693
        %v695 = vsub.f32 1.0, %v694
        %v696 = vmul.f32 %v693, %v695
        %v697 = vadd.f32 %v693, %v696
        %vm698 = vweird.f32 %v692
        %vm699 = vweird.f32 %v693
        %vm700 = vmor %vm698, %vm699
        %v701 = vsel %vm700, %v693, %v697
        %v702 = vand.u32 2147483647, %v692
        %vm703 = vcmp.eq.f32.partialorder %v702, 8.507059e+37
        %v704 = vand.u32 %v692, 2147483648
        %v705 = vor.u32 1.1754944e-38, %v704
        %v706 = vsel %vm703, %v705, %v701
        %v707 = vmul.f32 %v682, %v706
        %v708 = vmin.f32 %v707, 1.0
        %v709 = vmax.f32 %v708, -1.0
        %v710 = vmul.f32 %v561, %v561
        %v711 = vmin.f32 16.0, %v710
        %v712 = vmul.f32 %v711, 2.1237322e-06
        %v713 = vadd.f32 %v712, 0.00028619796
        %v714 = vmul.f32 %v711, %v713
        %v715 = vadd.f32 %v714, 0.0036580483
        %v716 = vmul.f32 %v711, %v715
        %v717 = vadd.f32 %v716, 0.05243302
        %v718 = vmul.f32 %v711, %v717
        %v719 = vadd.f32 %v718, 0.18741608
        %v720 = vmul.f32 %v711, %v719
        %v721 = vadd.f32 %v720, 1.1283791
        %v722 = vmul.f32 %v561, %v721
        %v723 = vmul.f32 %v711, 3.8918573e-05
        %v724 = vadd.f32 %v723, 0.001143296
        %v725 = vmul.f32 %v711, %v724
        %v726 = vadd.f32 %v725, 0.014752088
        %v727 = vmul.f32 %v711, %v726
        %v728 = vadd.f32 %v727, 0.112945676
        %v729 = vmul.f32 %v711, %v728
        %v730 = vadd.f32 %v729, 0.4994258
        %v731 = vmul.f32 %v711, %v730
        %v732 = vadd.f32 %v731, 1.0
        %v733 = vrcp.pop %v732
        %v734 = vmul.f32 %v732, %v733
        %v735 = vsub.f32 1.0, %v734
        %v736 = vmul.f32 %v733, %v735
        %v737 = vadd.f32 %v733, %v736
        %vm738 = vweird.f32 %v732
        %vm739 = vweird.f32 %v733
        %vm740 = vmor %vm738, %vm739
        %v741 = vsel %vm740, %v733, %v737
        %v742 = vand.u32 2147483647, %v732
        %vm743 = vcmp.eq.f32.partialorder %v742, 8.507059e+37
        %v744 = vand.u32 %v732, 2147483648
        %v745 = vor.u32 1.1754944e-38, %v744
        %v746 = vsel %vm743, %v745, %v741
        %v747 = vmul.f32 %v722, %v746
        %v748 = vmin.f32 %v747, 1.0
        %v749 = vmax.f32 %v748, -1.0
        %v750 = vmul.f32 %v562, %v562
        %v751 = vmin.f32 16.0, %v750
        %v752 = vmul.f32 %v751, 2.1237322e-06
        %v753 = vadd.f32 %v752, 0.00028619796
        %v754 = vmul.f32 %v751, %v753
        %v755 = vadd.f32 %v754, 0.0036580483
        %v756 = vmul.f32 %v751, %v755
        %v757 = vadd.f32 %v756, 0.05243302
        %v758 = vmul.f32 %v751, %v757
        %v759 = vadd.f32 %v758, 0.18741608
        %v760 = vmul.f32 %v751, %v759
        %v761 = vadd.f32 %v760, 1.1283791
        %v762 = vmul.f32 %v562, %v761
        %v763 = vmul.f32 %v751, 3.8918573e-05
        %v764 = vadd.f32 %v763, 0.001143296
        %v765 = vmul.f32 %v751, %v764
        %v766 = vadd.f32 %v765, 0.014752088
        %v767 = vmul.f32 %v751, %v766
        %v768 = vadd.f32 %v767, 0.112945676
        %v769 = vmul.f32 %v751, %v768
        %v770 = vadd.f32 %v769, 0.4994258
        %v771 = vmul.f32 %v751, %v770
        %v772 = vadd.f32 %v771, 1.0
        %v773 = vrcp.pop %v772
        %v774 = vmul.f32 %v772, %v773
        %v775 = vsub.f32 1.0, %v774
        %v776 = vmul.f32 %v773, %v775
        %v777 = vadd.f32 %v773, %v776
        %vm778 = vweird.f32 %v772
        %vm779 = vweird.f32 %v773
        %vm780 = vmor %vm778, %vm779
        %v781 = vsel %vm780, %v773, %v777
        %v782 = vand.u32 2147483647, %v772
        %vm783 = vcmp.eq.f32.partialorder %v782, 8.507059e+37
        %v784 = vand.u32 %v772, 2147483648
        %v785 = vor.u32 1.1754944e-38, %v784
        %v786 = vsel %vm783, %v785, %v781
        %v787 = vmul.f32 %v762, %v786
        %v788 = vmin.f32 %v787, 1.0
        %v789 = vmax.f32 %v788, -1.0
        %v790 = vmul.f32 %v563, %v563
        %v791 = vmin.f32 16.0, %v790
        %v792 = vmul.f32 %v791, 2.1237322e-06
        %v793 = vadd.f32 %v792, 0.00028619796
        %v794 = vmul.f32 %v791, %v793
        %v795 = vadd.f32 %v794, 0.0036580483
        %v796 = vmul.f32 %v791, %v795
        %v797 = vadd.f32 %v796, 0.05243302
        %v798 = vmul.f32 %v791, %v797
        %v799 = vadd.f32 %v798, 0.18741608
        %v800 = vmul.f32 %v791, %v799
        %v801 = vadd.f32 %v800, 1.1283791
        %v802 = vmul.f32 %v563, %v801
        %v803 = vmul.f32 %v791, 3.8918573e-05
        %v804 = vadd.f32 %v803, 0.001143296
        %v805 = vmul.f32 %v791, %v804
        %v806 = vadd.f32 %v805, 0.014752088
        %v807 = vmul.f32 %v791, %v806
        %v808 = vadd.f32 %v807, 0.112945676
        %v809 = vmul.f32 %v791, %v808
        %v810 = vadd.f32 %v809, 0.4994258
        %v811 = vmul.f32 %v791, %v810
        %v812 = vadd.f32 %v811, 1.0
        %v813 = vrcp.pop %v812
        %v814 = vmul.f32 %v812, %v813
        %v815 = vsub.f32 1.0, %v814
        %v816 = vmul.f32 %v813, %v815
        %v817 = vadd.f32 %v813, %v816
        %vm818 = vweird.f32 %v812
        %vm819 = vweird.f32 %v813
        %vm820 = vmor %vm818, %vm819
        %v821 = vsel %vm820, %v813, %v817
        %v822 = vand.u32 2147483647, %v812
        %vm823 = vcmp.eq.f32.partialorder %v822, 8.507059e+37
        %v824 = vand.u32 %v812, 2147483648
        %v825 = vor.u32 1.1754944e-38, %v824
        %v826 = vsel %vm823, %v825, %v821
        %v827 = vmul.f32 %v802, %v826
        %v828 = vmin.f32 %v827, 1.0
        %v829 = vmax.f32 %v828, -1.0
        %v830 = vmul.f32 %v564, %v564
        %v831 = vmin.f32 16.0, %v830
        %v832 = vmul.f32 %v831, 2.1237322e-06
        %v833 = vadd.f32 %v832, 0.00028619796
        %v834 = vmul.f32 %v831, %v833
        %v835 = vadd.f32 %v834, 0.0036580483
        %v836 = vmul.f32 %v831, %v835
        %v837 = vadd.f32 %v836, 0.05243302
        %v838 = vmul.f32 %v831, %v837
        %v839 = vadd.f32 %v838, 0.18741608
        %v840 = vmul.f32 %v831, %v839
        %v841 = vadd.f32 %v840, 1.1283791
        %v842 = vmul.f32 %v564, %v841
        %v843 = vmul.f32 %v831, 3.8918573e-05
        %v844 = vadd.f32 %v843, 0.001143296
        %v845 = vmul.f32 %v831, %v844
        %v846 = vadd.f32 %v845, 0.014752088
        %v847 = vmul.f32 %v831, %v846
        %v848 = vadd.f32 %v847, 0.112945676
        %v849 = vmul.f32 %v831, %v848
        %v850 = vadd.f32 %v849, 0.4994258
        %v851 = vmul.f32 %v831, %v850
        %v852 = vadd.f32 %v851, 1.0
        %v853 = vrcp.pop %v852
        %v854 = vmul.f32 %v852, %v853
        %v855 = vsub.f32 1.0, %v854
        %v856 = vmul.f32 %v853, %v855
        %v857 = vadd.f32 %v853, %v856
        %vm858 = vweird.f32 %v852
        %vm859 = vweird.f32 %v853
        %vm860 = vmor %vm858, %vm859
        %v861 = vsel %vm860, %v853, %v857
        %v862 = vand.u32 2147483647, %v852
        %vm863 = vcmp.eq.f32.partialorder %v862, 8.507059e+37
        %v864 = vand.u32 %v852, 2147483648
        %v865 = vor.u32 1.1754944e-38, %v864
        %v866 = vsel %vm863, %v865, %v861
        %v867 = vmul.f32 %v842, %v866
        %v868 = vmin.f32 %v867, 1.0
        %v869 = vmax.f32 %v868, -1.0
        %v870 = vmul.f32 %v565, %v565
        %v871 = vmin.f32 16.0, %v870
        %v872 = vmul.f32 %v871, 2.1237322e-06
        %v873 = vadd.f32 %v872, 0.00028619796
        %v874 = vmul.f32 %v871, %v873
        %v875 = vadd.f32 %v874, 0.0036580483
        %v876 = vmul.f32 %v871, %v875
        %v877 = vadd.f32 %v876, 0.05243302
        %v878 = vmul.f32 %v871, %v877
        %v879 = vadd.f32 %v878, 0.18741608
        %v880 = vmul.f32 %v871, %v879
        %v881 = vadd.f32 %v880, 1.1283791
        %v882 = vmul.f32 %v565, %v881
        %v883 = vmul.f32 %v871, 3.8918573e-05
        %v884 = vadd.f32 %v883, 0.001143296
        %v885 = vmul.f32 %v871, %v884
        %v886 = vadd.f32 %v885, 0.014752088
        %v887 = vmul.f32 %v871, %v886
        %v888 = vadd.f32 %v887, 0.112945676
        %v889 = vmul.f32 %v871, %v888
        %v890 = vadd.f32 %v889, 0.4994258
        %v891 = vmul.f32 %v871, %v890
        %v892 = vadd.f32 %v891, 1.0
        %v893 = vrcp.pop %v892
        %v894 = vmul.f32 %v892, %v893
        %v895 = vsub.f32 1.0, %v894
        %v896 = vmul.f32 %v893, %v895
        %v897 = vadd.f32 %v893, %v896
        %vm898 = vweird.f32 %v892
        %vm899 = vweird.f32 %v893
        %vm900 = vmor %vm898, %vm899
        %v901 = vsel %vm900, %v893, %v897
        %v902 = vand.u32 2147483647, %v892
        %vm903 = vcmp.eq.f32.partialorder %v902, 8.507059e+37
        %v904 = vand.u32 %v892, 2147483648
        %v905 = vor.u32 1.1754944e-38, %v904
        %v906 = vsel %vm903, %v905, %v901
        %v907 = vmul.f32 %v882, %v906
        %v908 = vmin.f32 %v907, 1.0
        %v909 = vmax.f32 %v908, -1.0
        %v910 = vmul.f32 %v566, %v566
        %v911 = vmin.f32 16.0, %v910
        %v912 = vmul.f32 %v911, 2.1237322e-06
        %v913 = vadd.f32 %v912, 0.00028619796
        %v914 = vmul.f32 %v911, %v913
        %v915 = vadd.f32 %v914, 0.0036580483
        %v916 = vmul.f32 %v911, %v915
        %v917 = vadd.f32 %v916, 0.05243302
        %v918 = vmul.f32 %v911, %v917
        %v919 = vadd.f32 %v918, 0.18741608
        %v920 = vmul.f32 %v911, %v919
        %v921 = vadd.f32 %v920, 1.1283791
        %v922 = vmul.f32 %v566, %v921
        %v923 = vmul.f32 %v911, 3.8918573e-05
        %v924 = vadd.f32 %v923, 0.001143296
        %v925 = vmul.f32 %v911, %v924
        %v926 = vadd.f32 %v925, 0.014752088
        %v927 = vmul.f32 %v911, %v926
        %v928 = vadd.f32 %v927, 0.112945676
        %v929 = vmul.f32 %v911, %v928
        %v930 = vadd.f32 %v929, 0.4994258
        %v931 = vmul.f32 %v911, %v930
        %v932 = vadd.f32 %v931, 1.0
        %v933 = vrcp.pop %v932
        %v934 = vmul.f32 %v932, %v933
        %v935 = vsub.f32 1.0, %v934
        %v936 = vmul.f32 %v933, %v935
        %v937 = vadd.f32 %v933, %v936
        %vm938 = vweird.f32 %v932
        %vm939 = vweird.f32 %v933
        %vm940 = vmor %vm938, %vm939
        %v941 = vsel %vm940, %v933, %v937
        %v942 = vand.u32 2147483647, %v932
        %vm943 = vcmp.eq.f32.partialorder %v942, 8.507059e+37
        %v944 = vand.u32 %v932, 2147483648
        %v945 = vor.u32 1.1754944e-38, %v944
        %v946 = vsel %vm943, %v945, %v941
        %v947 = vmul.f32 %v922, %v946
        %v948 = vmin.f32 %v947, 1.0
        %v949 = vmax.f32 %v948, -1.0
        %v950 = vmul.f32 %v567, %v567
        %v951 = vmin.f32 16.0, %v950
        %v952 = vmul.f32 %v951, 2.1237322e-06
        %v953 = vadd.f32 %v952, 0.00028619796
        %v954 = vmul.f32 %v951, %v953
        %v955 = vadd.f32 %v954, 0.0036580483
        %v956 = vmul.f32 %v951, %v955
        %v957 = vadd.f32 %v956, 0.05243302
        %v958 = vmul.f32 %v951, %v957
        %v959 = vadd.f32 %v958, 0.18741608
        %v960 = vmul.f32 %v951, %v959
        %v961 = vadd.f32 %v960, 1.1283791
        %v962 = vmul.f32 %v567, %v961
        %v963 = vmul.f32 %v951, 3.8918573e-05
        %v964 = vadd.f32 %v963, 0.001143296
        %v965 = vmul.f32 %v951, %v964
        %v966 = vadd.f32 %v965, 0.014752088
        %v967 = vmul.f32 %v951, %v966
        %v968 = vadd.f32 %v967, 0.112945676
        %v969 = vmul.f32 %v951, %v968
        %v970 = vadd.f32 %v969, 0.4994258
        %v971 = vmul.f32 %v951, %v970
        %v972 = vadd.f32 %v971, 1.0
        %v973 = vrcp.pop %v972
        %v974 = vmul.f32 %v972, %v973
        %v975 = vsub.f32 1.0, %v974
        %v976 = vmul.f32 %v973, %v975
        %v977 = vadd.f32 %v973, %v976
        %vm978 = vweird.f32 %v972
        %vm979 = vweird.f32 %v973
        %vm980 = vmor %vm978, %vm979
        %v981 = vsel %vm980, %v973, %v977
        %v982 = vand.u32 2147483647, %v972
        %vm983 = vcmp.eq.f32.partialorder %v982, 8.507059e+37
        %v984 = vand.u32 %v972, 2147483648
        %v985 = vor.u32 1.1754944e-38, %v984
        %v986 = vsel %vm983, %v985, %v981
        %v987 = vmul.f32 %v962, %v986
        %v988 = vmin.f32 %v987, 1.0
        %v989 = vmax.f32 %v988, -1.0
        %v990 = vmul.f32 %v568, %v568
        %v991 = vmin.f32 16.0, %v990
        %v992 = vmul.f32 %v991, 2.1237322e-06
        %v993 = vadd.f32 %v992, 0.00028619796
        %v994 = vmul.f32 %v991, %v993
        %v995 = vadd.f32 %v994, 0.0036580483
        %v996 = vmul.f32 %v991, %v995
        %v997 = vadd.f32 %v996, 0.05243302
        %v998 = vmul.f32 %v991, %v997
        %v999 = vadd.f32 %v998, 0.18741608
        %v1000 = vmul.f32 %v991, %v999
        %v1001 = vadd.f32 %v1000, 1.1283791
        %v1002 = vmul.f32 %v568, %v1001
        %v1003 = vmul.f32 %v991, 3.8918573e-05
        %v1004 = vadd.f32 %v1003, 0.001143296
        %v1005 = vmul.f32 %v991, %v1004
        %v1006 = vadd.f32 %v1005, 0.014752088
        %v1007 = vmul.f32 %v991, %v1006
        %v1008 = vadd.f32 %v1007, 0.112945676
        %v1009 = vmul.f32 %v991, %v1008
        %v1010 = vadd.f32 %v1009, 0.4994258
        %v1011 = vmul.f32 %v991, %v1010
        %v1012 = vadd.f32 %v1011, 1.0
        %v1013 = vrcp.pop %v1012
        %v1014 = vmul.f32 %v1012, %v1013
        %v1015 = vsub.f32 1.0, %v1014
        %v1016 = vmul.f32 %v1013, %v1015
        %v1017 = vadd.f32 %v1013, %v1016
        %vm1018 = vweird.f32 %v1012
        %vm1019 = vweird.f32 %v1013
        %vm1020 = vmor %vm1018, %vm1019
        %v1021 = vsel %vm1020, %v1013, %v1017
        %v1022 = vand.u32 2147483647, %v1012
        %vm1023 = vcmp.eq.f32.partialorder %v1022, 8.507059e+37
        %v1024 = vand.u32 %v1012, 2147483648
        %v1025 = vor.u32 1.1754944e-38, %v1024
        %v1026 = vsel %vm1023, %v1025, %v1021
        %v1027 = vmul.f32 %v1002, %v1026
        %v1028 = vmin.f32 %v1027, 1.0
        %v1029 = vmax.f32 %v1028, -1.0
        %v1030 = vmul.f32 %v569, %v569
        %v1031 = vmin.f32 16.0, %v1030
        %v1032 = vmul.f32 %v1031, 2.1237322e-06
        %v1033 = vadd.f32 %v1032, 0.00028619796
        %v1034 = vmul.f32 %v1031, %v1033
        %v1035 = vadd.f32 %v1034, 0.0036580483
        %v1036 = vmul.f32 %v1031, %v1035
        %v1037 = vadd.f32 %v1036, 0.05243302
        %v1038 = vmul.f32 %v1031, %v1037
        %v1039 = vadd.f32 %v1038, 0.18741608
        %v1040 = vmul.f32 %v1031, %v1039
        %v1041 = vadd.f32 %v1040, 1.1283791
        %v1042 = vmul.f32 %v569, %v1041
        %v1043 = vmul.f32 %v1031, 3.8918573e-05
        %v1044 = vadd.f32 %v1043, 0.001143296
        %v1045 = vmul.f32 %v1031, %v1044
        %v1046 = vadd.f32 %v1045, 0.014752088
        %v1047 = vmul.f32 %v1031, %v1046
        %v1048 = vadd.f32 %v1047, 0.112945676
        %v1049 = vmul.f32 %v1031, %v1048
        %v1050 = vadd.f32 %v1049, 0.4994258
        %v1051 = vmul.f32 %v1031, %v1050
        %v1052 = vadd.f32 %v1051, 1.0
        %v1053 = vrcp.pop %v1052
        %v1054 = vmul.f32 %v1052, %v1053
        %v1055 = vsub.f32 1.0, %v1054
        %v1056 = vmul.f32 %v1053, %v1055
        %v1057 = vadd.f32 %v1053, %v1056
        %vm1058 = vweird.f32 %v1052
        %vm1059 = vweird.f32 %v1053
        %vm1060 = vmor %vm1058, %vm1059
        %v1061 = vsel %vm1060, %v1053, %v1057
        %v1062 = vand.u32 2147483647, %v1052
        %vm1063 = vcmp.eq.f32.partialorder %v1062, 8.507059e+37
        %v1064 = vand.u32 %v1052, 2147483648
        %v1065 = vor.u32 1.1754944e-38, %v1064
        %v1066 = vsel %vm1063, %v1065, %v1061
        %v1067 = vmul.f32 %v1042, %v1066
        %v1068 = vmin.f32 %v1067, 1.0
        %v1069 = vmax.f32 %v1068, -1.0
        %v1070 = vmul.f32 %v570, %v570
        %v1071 = vmin.f32 16.0, %v1070
        %v1072 = vmul.f32 %v1071, 2.1237322e-06
        %v1073 = vadd.f32 %v1072, 0.00028619796
        %v1074 = vmul.f32 %v1071, %v1073
        %v1075 = vadd.f32 %v1074, 0.0036580483
        %v1076 = vmul.f32 %v1071, %v1075
        %v1077 = vadd.f32 %v1076, 0.05243302
        %v1078 = vmul.f32 %v1071, %v1077
        %v1079 = vadd.f32 %v1078, 0.18741608
        %v1080 = vmul.f32 %v1071, %v1079
        %v1081 = vadd.f32 %v1080, 1.1283791
        %v1082 = vmul.f32 %v570, %v1081
        %v1083 = vmul.f32 %v1071, 3.8918573e-05
        %v1084 = vadd.f32 %v1083, 0.001143296
        %v1085 = vmul.f32 %v1071, %v1084
        %v1086 = vadd.f32 %v1085, 0.014752088
        %v1087 = vmul.f32 %v1071, %v1086
        %v1088 = vadd.f32 %v1087, 0.112945676
        %v1089 = vmul.f32 %v1071, %v1088
        %v1090 = vadd.f32 %v1089, 0.4994258
        %v1091 = vmul.f32 %v1071, %v1090
        %v1092 = vadd.f32 %v1091, 1.0
        %v1093 = vrcp.pop %v1092
        %v1094 = vmul.f32 %v1092, %v1093
        %v1095 = vsub.f32 1.0, %v1094
        %v1096 = vmul.f32 %v1093, %v1095
        %v1097 = vadd.f32 %v1093, %v1096
        %vm1098 = vweird.f32 %v1092
        %vm1099 = vweird.f32 %v1093
        %vm1100 = vmor %vm1098, %vm1099
        %v1101 = vsel %vm1100, %v1093, %v1097
        %v1102 = vand.u32 2147483647, %v1092
        %vm1103 = vcmp.eq.f32.partialorder %v1102, 8.507059e+37
        %v1104 = vand.u32 %v1092, 2147483648
        %v1105 = vor.u32 1.1754944e-38, %v1104
        %v1106 = vsel %vm1103, %v1105, %v1101
        %v1107 = vmul.f32 %v1082, %v1106
        %v1108 = vmin.f32 %v1107, 1.0
        %v1109 = vmax.f32 %v1108, -1.0
        %v1110 = vmul.f32 %v571, %v571
        %v1111 = vmin.f32 16.0, %v1110
        %v1112 = vmul.f32 %v1111, 2.1237322e-06
        %v1113 = vadd.f32 %v1112, 0.00028619796
        %v1114 = vmul.f32 %v1111, %v1113
        %v1115 = vadd.f32 %v1114, 0.0036580483
        %v1116 = vmul.f32 %v1111, %v1115
        %v1117 = vadd.f32 %v1116, 0.05243302
        %v1118 = vmul.f32 %v1111, %v1117
        %v1119 = vadd.f32 %v1118, 0.18741608
        %v1120 = vmul.f32 %v1111, %v1119
        %v1121 = vadd.f32 %v1120, 1.1283791
        %v1122 = vmul.f32 %v571, %v1121
        %v1123 = vmul.f32 %v1111, 3.8918573e-05
        %v1124 = vadd.f32 %v1123, 0.001143296
        %v1125 = vmul.f32 %v1111, %v1124
        %v1126 = vadd.f32 %v1125, 0.014752088
        %v1127 = vmul.f32 %v1111, %v1126
        %v1128 = vadd.f32 %v1127, 0.112945676
        %v1129 = vmul.f32 %v1111, %v1128
        %v1130 = vadd.f32 %v1129, 0.4994258
        %v1131 = vmul.f32 %v1111, %v1130
        %v1132 = vadd.f32 %v1131, 1.0
        %v1133 = vrcp.pop %v1132
        %v1134 = vmul.f32 %v1132, %v1133
        %v1135 = vsub.f32 1.0, %v1134
        %v1136 = vmul.f32 %v1133, %v1135
        %v1137 = vadd.f32 %v1133, %v1136
        %vm1138 = vweird.f32 %v1132
        %vm1139 = vweird.f32 %v1133
        %vm1140 = vmor %vm1138, %vm1139
        %v1141 = vsel %vm1140, %v1133, %v1137
        %v1142 = vand.u32 2147483647, %v1132
        %vm1143 = vcmp.eq.f32.partialorder %v1142, 8.507059e+37
        %v1144 = vand.u32 %v1132, 2147483648
        %v1145 = vor.u32 1.1754944e-38, %v1144
        %v1146 = vsel %vm1143, %v1145, %v1141
        %v1147 = vmul.f32 %v1122, %v1146
        %v1148 = vmin.f32 %v1147, 1.0
        %v1149 = vmax.f32 %v1148, -1.0
        %v1150 = vmul.f32 %v572, %v572
        %v1151 = vmin.f32 16.0, %v1150
        %v1152 = vmul.f32 %v1151, 2.1237322e-06
        %v1153 = vadd.f32 %v1152, 0.00028619796
        %v1154 = vmul.f32 %v1151, %v1153
        %v1155 = vadd.f32 %v1154, 0.0036580483
        %v1156 = vmul.f32 %v1151, %v1155
        %v1157 = vadd.f32 %v1156, 0.05243302
        %v1158 = vmul.f32 %v1151, %v1157
        %v1159 = vadd.f32 %v1158, 0.18741608
        %v1160 = vmul.f32 %v1151, %v1159
        %v1161 = vadd.f32 %v1160, 1.1283791
        %v1162 = vmul.f32 %v572, %v1161
        %v1163 = vmul.f32 %v1151, 3.8918573e-05
        %v1164 = vadd.f32 %v1163, 0.001143296
        %v1165 = vmul.f32 %v1151, %v1164
        %v1166 = vadd.f32 %v1165, 0.014752088
        %v1167 = vmul.f32 %v1151, %v1166
        %v1168 = vadd.f32 %v1167, 0.112945676
        %v1169 = vmul.f32 %v1151, %v1168
        %v1170 = vadd.f32 %v1169, 0.4994258
        %v1171 = vmul.f32 %v1151, %v1170
        %v1172 = vadd.f32 %v1171, 1.0
        %v1173 = vrcp.pop %v1172
        %v1174 = vmul.f32 %v1172, %v1173
        %v1175 = vsub.f32 1.0, %v1174
        %v1176 = vmul.f32 %v1173, %v1175
        %v1177 = vadd.f32 %v1173, %v1176
        %vm1178 = vweird.f32 %v1172
        %vm1179 = vweird.f32 %v1173
        %vm1180 = vmor %vm1178, %vm1179
        %v1181 = vsel %vm1180, %v1173, %v1177
        %v1182 = vand.u32 2147483647, %v1172
        %vm1183 = vcmp.eq.f32.partialorder %v1182, 8.507059e+37
        %v1184 = vand.u32 %v1172, 2147483648
        %v1185 = vor.u32 1.1754944e-38, %v1184
        %v1186 = vsel %vm1183, %v1185, %v1181
        %v1187 = vmul.f32 %v1162, %v1186
        %v1188 = vmin.f32 %v1187, 1.0
        %v1189 = vmax.f32 %v1188, -1.0
        %v1190 = vmul.f32 %v573, %v573
        %v1191 = vmin.f32 16.0, %v1190
        %v1192 = vmul.f32 %v1191, 2.1237322e-06
        %v1193 = vadd.f32 %v1192, 0.00028619796
        %v1194 = vmul.f32 %v1191, %v1193
        %v1195 = vadd.f32 %v1194, 0.0036580483
        %v1196 = vmul.f32 %v1191, %v1195
        %v1197 = vadd.f32 %v1196, 0.05243302
        %v1198 = vmul.f32 %v1191, %v1197
        %v1199 = vadd.f32 %v1198, 0.18741608
        %v1200 = vmul.f32 %v1191, %v1199
        %v1201 = vadd.f32 %v1200, 1.1283791
        %v1202 = vmul.f32 %v573, %v1201
        %v1203 = vmul.f32 %v1191, 3.8918573e-05
        %v1204 = vadd.f32 %v1203, 0.001143296
        %v1205 = vmul.f32 %v1191, %v1204
        %v1206 = vadd.f32 %v1205, 0.014752088
        %v1207 = vmul.f32 %v1191, %v1206
        %v1208 = vadd.f32 %v1207, 0.112945676
        %v1209 = vmul.f32 %v1191, %v1208
        %v1210 = vadd.f32 %v1209, 0.4994258
        %v1211 = vmul.f32 %v1191, %v1210
        %v1212 = vadd.f32 %v1211, 1.0
        %v1213 = vrcp.pop %v1212
        %v1214 = vmul.f32 %v1212, %v1213
        %v1215 = vsub.f32 1.0, %v1214
        %v1216 = vmul.f32 %v1213, %v1215
        %v1217 = vadd.f32 %v1213, %v1216
        %vm1218 = vweird.f32 %v1212
        %vm1219 = vweird.f32 %v1213
        %vm1220 = vmor %vm1218, %vm1219
        %v1221 = vsel %vm1220, %v1213, %v1217
        %v1222 = vand.u32 2147483647, %v1212
        %vm1223 = vcmp.eq.f32.partialorder %v1222, 8.507059e+37
        %v1224 = vand.u32 %v1212, 2147483648
        %v1225 = vor.u32 1.1754944e-38, %v1224
        %v1226 = vsel %vm1223, %v1225, %v1221
        %v1227 = vmul.f32 %v1202, %v1226
        %v1228 = vmin.f32 %v1227, 1.0
        %v1229 = vmax.f32 %v1228, -1.0
        %v1230 = vmul.f32 %v574, %v574
        %v1231 = vmin.f32 16.0, %v1230
        %v1232 = vmul.f32 %v1231, 2.1237322e-06
        %v1233 = vadd.f32 %v1232, 0.00028619796
        %v1234 = vmul.f32 %v1231, %v1233
        %v1235 = vadd.f32 %v1234, 0.0036580483
        %v1236 = vmul.f32 %v1231, %v1235
        %v1237 = vadd.f32 %v1236, 0.05243302
        %v1238 = vmul.f32 %v1231, %v1237
        %v1239 = vadd.f32 %v1238, 0.18741608
        %v1240 = vmul.f32 %v1231, %v1239
        %v1241 = vadd.f32 %v1240, 1.1283791
        %v1242 = vmul.f32 %v574, %v1241
        %v1243 = vmul.f32 %v1231, 3.8918573e-05
        %v1244 = vadd.f32 %v1243, 0.001143296
        %v1245 = vmul.f32 %v1231, %v1244
        %v1246 = vadd.f32 %v1245, 0.014752088
        %v1247 = vmul.f32 %v1231, %v1246
        %v1248 = vadd.f32 %v1247, 0.112945676
        %v1249 = vmul.f32 %v1231, %v1248
        %v1250 = vadd.f32 %v1249, 0.4994258
        %v1251 = vmul.f32 %v1231, %v1250
        %v1252 = vadd.f32 %v1251, 1.0
        %v1253 = vrcp.pop %v1252
        %v1254 = vmul.f32 %v1252, %v1253
        %v1255 = vsub.f32 1.0, %v1254
        %v1256 = vmul.f32 %v1253, %v1255
        %v1257 = vadd.f32 %v1253, %v1256
        %vm1258 = vweird.f32 %v1252
        %vm1259 = vweird.f32 %v1253
        %vm1260 = vmor %vm1258, %vm1259
        %v1261 = vsel %vm1260, %v1253, %v1257
        %v1262 = vand.u32 2147483647, %v1252
        %vm1263 = vcmp.eq.f32.partialorder %v1262, 8.507059e+37
        %v1264 = vand.u32 %v1252, 2147483648
        %v1265 = vor.u32 1.1754944e-38, %v1264
        %v1266 = vsel %vm1263, %v1265, %v1261
        %v1267 = vmul.f32 %v1242, %v1266
        %v1268 = vmin.f32 %v1267, 1.0
        %v1269 = vmax.f32 %v1268, -1.0
        %v1270 = vmul.f32 %v575, %v575
        %v1271 = vmin.f32 16.0, %v1270
        %v1272 = vmul.f32 %v1271, 2.1237322e-06
        %v1273 = vadd.f32 %v1272, 0.00028619796
        %v1274 = vmul.f32 %v1271, %v1273
        %v1275 = vadd.f32 %v1274, 0.0036580483
        %v1276 = vmul.f32 %v1271, %v1275
        %v1277 = vadd.f32 %v1276, 0.05243302
        %v1278 = vmul.f32 %v1271, %v1277
        %v1279 = vadd.f32 %v1278, 0.18741608
        %v1280 = vmul.f32 %v1271, %v1279
        %v1281 = vadd.f32 %v1280, 1.1283791
        %v1282 = vmul.f32 %v575, %v1281
        %v1283 = vmul.f32 %v1271, 3.8918573e-05
        %v1284 = vadd.f32 %v1283, 0.001143296
        %v1285 = vmul.f32 %v1271, %v1284
        %v1286 = vadd.f32 %v1285, 0.014752088
        %v1287 = vmul.f32 %v1271, %v1286
        %v1288 = vadd.f32 %v1287, 0.112945676
        %v1289 = vmul.f32 %v1271, %v1288
        %v1290 = vadd.f32 %v1289, 0.4994258
        %v1291 = vmul.f32 %v1271, %v1290
        %v1292 = vadd.f32 %v1291, 1.0
        %v1293 = vrcp.pop %v1292
        %v1294 = vmul.f32 %v1292, %v1293
        %v1295 = vsub.f32 1.0, %v1294
        %v1296 = vmul.f32 %v1293, %v1295
        %v1297 = vadd.f32 %v1293, %v1296
        %vm1298 = vweird.f32 %v1292
        %vm1299 = vweird.f32 %v1293
        %vm1300 = vmor %vm1298, %vm1299
        %v1301 = vsel %vm1300, %v1293, %v1297
        %v1302 = vand.u32 2147483647, %v1292
        %vm1303 = vcmp.eq.f32.partialorder %v1302, 8.507059e+37
        %v1304 = vand.u32 %v1292, 2147483648
        %v1305 = vor.u32 1.1754944e-38, %v1304
        %v1306 = vsel %vm1303, %v1305, %v1301
        %v1307 = vmul.f32 %v1282, %v1306
        %v1308 = vmin.f32 %v1307, 1.0
        %v1309 = vmax.f32 %v1308, -1.0
        %v1310 = vmul.f32 %v576, %v576
        %v1311 = vmin.f32 16.0, %v1310
        %v1312 = vmul.f32 %v1311, 2.1237322e-06
        %v1313 = vadd.f32 %v1312, 0.00028619796
        %v1314 = vmul.f32 %v1311, %v1313
        %v1315 = vadd.f32 %v1314, 0.0036580483
        %v1316 = vmul.f32 %v1311, %v1315
        %v1317 = vadd.f32 %v1316, 0.05243302
        %v1318 = vmul.f32 %v1311, %v1317
        %v1319 = vadd.f32 %v1318, 0.18741608
        %v1320 = vmul.f32 %v1311, %v1319
        %v1321 = vadd.f32 %v1320, 1.1283791
        %v1322 = vmul.f32 %v576, %v1321
        %v1323 = vmul.f32 %v1311, 3.8918573e-05
        %v1324 = vadd.f32 %v1323, 0.001143296
        %v1325 = vmul.f32 %v1311, %v1324
        %v1326 = vadd.f32 %v1325, 0.014752088
        %v1327 = vmul.f32 %v1311, %v1326
        %v1328 = vadd.f32 %v1327, 0.112945676
        %v1329 = vmul.f32 %v1311, %v1328
        %v1330 = vadd.f32 %v1329, 0.4994258
        %v1331 = vmul.f32 %v1311, %v1330
        %v1332 = vadd.f32 %v1331, 1.0
        %v1333 = vrcp.pop %v1332
        %v1334 = vmul.f32 %v1332, %v1333
        %v1335 = vsub.f32 1.0, %v1334
        %v1336 = vmul.f32 %v1333, %v1335
        %v1337 = vadd.f32 %v1333, %v1336
        %vm1338 = vweird.f32 %v1332
        %vm1339 = vweird.f32 %v1333
        %vm1340 = vmor %vm1338, %vm1339
        %v1341 = vsel %vm1340, %v1333, %v1337
        %v1342 = vand.u32 2147483647, %v1332
        %vm1343 = vcmp.eq.f32.partialorder %v1342, 8.507059e+37
        %v1344 = vand.u32 %v1332, 2147483648
        %v1345 = vor.u32 1.1754944e-38, %v1344
        %v1346 = vsel %vm1343, %v1345, %v1341
        %v1347 = vmul.f32 %v1322, %v1346
        %v1348 = vmin.f32 %v1347, 1.0
        %v1349 = vmax.f32 %v1348, -1.0
        %v1350 = vmul.f32 %v577, %v577
        %v1351 = vmin.f32 16.0, %v1350
        %v1352 = vmul.f32 %v1351, 2.1237322e-06
        %v1353 = vadd.f32 %v1352, 0.00028619796
        %v1354 = vmul.f32 %v1351, %v1353
        %v1355 = vadd.f32 %v1354, 0.0036580483
        %v1356 = vmul.f32 %v1351, %v1355
        %v1357 = vadd.f32 %v1356, 0.05243302
        %v1358 = vmul.f32 %v1351, %v1357
        %v1359 = vadd.f32 %v1358, 0.18741608
        %v1360 = vmul.f32 %v1351, %v1359
        %v1361 = vadd.f32 %v1360, 1.1283791
        %v1362 = vmul.f32 %v577, %v1361
        %v1363 = vmul.f32 %v1351, 3.8918573e-05
        %v1364 = vadd.f32 %v1363, 0.001143296
        %v1365 = vmul.f32 %v1351, %v1364
        %v1366 = vadd.f32 %v1365, 0.014752088
        %v1367 = vmul.f32 %v1351, %v1366
        %v1368 = vadd.f32 %v1367, 0.112945676
        %v1369 = vmul.f32 %v1351, %v1368
        %v1370 = vadd.f32 %v1369, 0.4994258
        %v1371 = vmul.f32 %v1351, %v1370
        %v1372 = vadd.f32 %v1371, 1.0
        %v1373 = vrcp.pop %v1372
        %v1374 = vmul.f32 %v1372, %v1373
        %v1375 = vsub.f32 1.0, %v1374
        %v1376 = vmul.f32 %v1373, %v1375
        %v1377 = vadd.f32 %v1373, %v1376
        %vm1378 = vweird.f32 %v1372
        %vm1379 = vweird.f32 %v1373
        %vm1380 = vmor %vm1378, %vm1379
        %v1381 = vsel %vm1380, %v1373, %v1377
        %v1382 = vand.u32 2147483647, %v1372
        %vm1383 = vcmp.eq.f32.partialorder %v1382, 8.507059e+37
        %v1384 = vand.u32 %v1372, 2147483648
        %v1385 = vor.u32 1.1754944e-38, %v1384
        %v1386 = vsel %vm1383, %v1385, %v1381
        %v1387 = vmul.f32 %v1362, %v1386
        %v1388 = vmin.f32 %v1387, 1.0
        %v1389 = vmax.f32 %v1388, -1.0
        %v1390 = vmul.f32 %v578, %v578
        %v1391 = vmin.f32 16.0, %v1390
        %v1392 = vmul.f32 %v1391, 2.1237322e-06
        %v1393 = vadd.f32 %v1392, 0.00028619796
        %v1394 = vmul.f32 %v1391, %v1393
        %v1395 = vadd.f32 %v1394, 0.0036580483
        %v1396 = vmul.f32 %v1391, %v1395
        %v1397 = vadd.f32 %v1396, 0.05243302
        %v1398 = vmul.f32 %v1391, %v1397
        %v1399 = vadd.f32 %v1398, 0.18741608
        %v1400 = vmul.f32 %v1391, %v1399
        %v1401 = vadd.f32 %v1400, 1.1283791
        %v1402 = vmul.f32 %v578, %v1401
        %v1403 = vmul.f32 %v1391, 3.8918573e-05
        %v1404 = vadd.f32 %v1403, 0.001143296
        %v1405 = vmul.f32 %v1391, %v1404
        %v1406 = vadd.f32 %v1405, 0.014752088
        %v1407 = vmul.f32 %v1391, %v1406
        %v1408 = vadd.f32 %v1407, 0.112945676
        %v1409 = vmul.f32 %v1391, %v1408
        %v1410 = vadd.f32 %v1409, 0.4994258
        %v1411 = vmul.f32 %v1391, %v1410
        %v1412 = vadd.f32 %v1411, 1.0
        %v1413 = vrcp.pop %v1412
        %v1414 = vmul.f32 %v1412, %v1413
        %v1415 = vsub.f32 1.0, %v1414
        %v1416 = vmul.f32 %v1413, %v1415
        %v1417 = vadd.f32 %v1413, %v1416
        %vm1418 = vweird.f32 %v1412
        %vm1419 = vweird.f32 %v1413
        %vm1420 = vmor %vm1418, %vm1419
        %v1421 = vsel %vm1420, %v1413, %v1417
        %v1422 = vand.u32 2147483647, %v1412
        %vm1423 = vcmp.eq.f32.partialorder %v1422, 8.507059e+37
        %v1424 = vand.u32 %v1412, 2147483648
        %v1425 = vor.u32 1.1754944e-38, %v1424
        %v1426 = vsel %vm1423, %v1425, %v1421
        %v1427 = vmul.f32 %v1402, %v1426
        %v1428 = vmin.f32 %v1427, 1.0
        %v1429 = vmax.f32 %v1428, -1.0
        %v1430 = vmul.f32 %v579, %v579
        %v1431 = vmin.f32 16.0, %v1430
        %v1432 = vmul.f32 %v1431, 2.1237322e-06
        %v1433 = vadd.f32 %v1432, 0.00028619796
        %v1434 = vmul.f32 %v1431, %v1433
        %v1435 = vadd.f32 %v1434, 0.0036580483
        %v1436 = vmul.f32 %v1431, %v1435
        %v1437 = vadd.f32 %v1436, 0.05243302
        %v1438 = vmul.f32 %v1431, %v1437
        %v1439 = vadd.f32 %v1438, 0.18741608
        %v1440 = vmul.f32 %v1431, %v1439
        %v1441 = vadd.f32 %v1440, 1.1283791
        %v1442 = vmul.f32 %v579, %v1441
        %v1443 = vmul.f32 %v1431, 3.8918573e-05
        %v1444 = vadd.f32 %v1443, 0.001143296
        %v1445 = vmul.f32 %v1431, %v1444
        %v1446 = vadd.f32 %v1445, 0.014752088
        %v1447 = vmul.f32 %v1431, %v1446
        %v1448 = vadd.f32 %v1447, 0.112945676
        %v1449 = vmul.f32 %v1431, %v1448
        %v1450 = vadd.f32 %v1449, 0.4994258
        %v1451 = vmul.f32 %v1431, %v1450
        %v1452 = vadd.f32 %v1451, 1.0
        %v1453 = vrcp.pop %v1452
        %v1454 = vmul.f32 %v1452, %v1453
        %v1455 = vsub.f32 1.0, %v1454
        %v1456 = vmul.f32 %v1453, %v1455
        %v1457 = vadd.f32 %v1453, %v1456
        %vm1458 = vweird.f32 %v1452
        %vm1459 = vweird.f32 %v1453
        %vm1460 = vmor %vm1458, %vm1459
        %v1461 = vsel %vm1460, %v1453, %v1457
        %v1462 = vand.u32 2147483647, %v1452
        %vm1463 = vcmp.eq.f32.partialorder %v1462, 8.507059e+37
        %v1464 = vand.u32 %v1452, 2147483648
        %v1465 = vor.u32 1.1754944e-38, %v1464
        %v1466 = vsel %vm1463, %v1465, %v1461
        %v1467 = vmul.f32 %v1442, %v1466
        %v1468 = vmin.f32 %v1467, 1.0
        %v1469 = vmax.f32 %v1468, -1.0
        %v1470 = vmul.f32 %v580, %v580
        %v1471 = vmin.f32 16.0, %v1470
        %v1472 = vmul.f32 %v1471, 2.1237322e-06
        %v1473 = vadd.f32 %v1472, 0.00028619796
        %v1474 = vmul.f32 %v1471, %v1473
        %v1475 = vadd.f32 %v1474, 0.0036580483
        %v1476 = vmul.f32 %v1471, %v1475
        %v1477 = vadd.f32 %v1476, 0.05243302
        %v1478 = vmul.f32 %v1471, %v1477
        %v1479 = vadd.f32 %v1478, 0.18741608
        %v1480 = vmul.f32 %v1471, %v1479
        %v1481 = vadd.f32 %v1480, 1.1283791
        %v1482 = vmul.f32 %v580, %v1481
        %v1483 = vmul.f32 %v1471, 3.8918573e-05
        %v1484 = vadd.f32 %v1483, 0.001143296
        %v1485 = vmul.f32 %v1471, %v1484
        %v1486 = vadd.f32 %v1485, 0.014752088
        %v1487 = vmul.f32 %v1471, %v1486
        %v1488 = vadd.f32 %v1487, 0.112945676
        %v1489 = vmul.f32 %v1471, %v1488
        %v1490 = vadd.f32 %v1489, 0.4994258
        %v1491 = vmul.f32 %v1471, %v1490
        %v1492 = vadd.f32 %v1491, 1.0
        %v1493 = vrcp.pop %v1492
        %v1494 = vmul.f32 %v1492, %v1493
        %v1495 = vsub.f32 1.0, %v1494
        %v1496 = vmul.f32 %v1493, %v1495
        %v1497 = vadd.f32 %v1493, %v1496
        %vm1498 = vweird.f32 %v1492
        %vm1499 = vweird.f32 %v1493
        %vm1500 = vmor %vm1498, %vm1499
        %v1501 = vsel %vm1500, %v1493, %v1497
        %v1502 = vand.u32 2147483647, %v1492
        %vm1503 = vcmp.eq.f32.partialorder %v1502, 8.507059e+37
        %v1504 = vand.u32 %v1492, 2147483648
        %v1505 = vor.u32 1.1754944e-38, %v1504
        %v1506 = vsel %vm1503, %v1505, %v1501
        %v1507 = vmul.f32 %v1482, %v1506
        %v1508 = vmin.f32 %v1507, 1.0
        %v1509 = vmax.f32 %v1508, -1.0
        %v1510 = vmul.f32 %v581, %v581
        %v1511 = vmin.f32 16.0, %v1510
        %v1512 = vmul.f32 %v1511, 2.1237322e-06
        %v1513 = vadd.f32 %v1512, 0.00028619796
        %v1514 = vmul.f32 %v1511, %v1513
        %v1515 = vadd.f32 %v1514, 0.0036580483
        %v1516 = vmul.f32 %v1511, %v1515
        %v1517 = vadd.f32 %v1516, 0.05243302
        %v1518 = vmul.f32 %v1511, %v1517
        %v1519 = vadd.f32 %v1518, 0.18741608
        %v1520 = vmul.f32 %v1511, %v1519
        %v1521 = vadd.f32 %v1520, 1.1283791
        %v1522 = vmul.f32 %v581, %v1521
        %v1523 = vmul.f32 %v1511, 3.8918573e-05
        %v1524 = vadd.f32 %v1523, 0.001143296
        %v1525 = vmul.f32 %v1511, %v1524
        %v1526 = vadd.f32 %v1525, 0.014752088
        %v1527 = vmul.f32 %v1511, %v1526
        %v1528 = vadd.f32 %v1527, 0.112945676
        %v1529 = vmul.f32 %v1511, %v1528
        %v1530 = vadd.f32 %v1529, 0.4994258
        %v1531 = vmul.f32 %v1511, %v1530
        %v1532 = vadd.f32 %v1531, 1.0
        %v1533 = vrcp.pop %v1532
        %v1534 = vmul.f32 %v1532, %v1533
        %v1535 = vsub.f32 1.0, %v1534
        %v1536 = vmul.f32 %v1533, %v1535
        %v1537 = vadd.f32 %v1533, %v1536
        %vm1538 = vweird.f32 %v1532
        %vm1539 = vweird.f32 %v1533
        %vm1540 = vmor %vm1538, %vm1539
        %v1541 = vsel %vm1540, %v1533, %v1537
        %v1542 = vand.u32 2147483647, %v1532
        %vm1543 = vcmp.eq.f32.partialorder %v1542, 8.507059e+37
        %v1544 = vand.u32 %v1532, 2147483648
        %v1545 = vor.u32 1.1754944e-38, %v1544
        %v1546 = vsel %vm1543, %v1545, %v1541
        %v1547 = vmul.f32 %v1522, %v1546
        %v1548 = vmin.f32 %v1547, 1.0
        %v1549 = vmax.f32 %v1548, -1.0
        %v1550 = vmul.f32 %v582, %v582
        %v1551 = vmin.f32 16.0, %v1550
        %v1552 = vmul.f32 %v1551, 2.1237322e-06
        %v1553 = vadd.f32 %v1552, 0.00028619796
        %v1554 = vmul.f32 %v1551, %v1553
        %v1555 = vadd.f32 %v1554, 0.0036580483
        %v1556 = vmul.f32 %v1551, %v1555
        %v1557 = vadd.f32 %v1556, 0.05243302
        %v1558 = vmul.f32 %v1551, %v1557
        %v1559 = vadd.f32 %v1558, 0.18741608
        %v1560 = vmul.f32 %v1551, %v1559
        %v1561 = vadd.f32 %v1560, 1.1283791
        %v1562 = vmul.f32 %v582, %v1561
        %v1563 = vmul.f32 %v1551, 3.8918573e-05
        %v1564 = vadd.f32 %v1563, 0.001143296
        %v1565 = vmul.f32 %v1551, %v1564
        %v1566 = vadd.f32 %v1565, 0.014752088
        %v1567 = vmul.f32 %v1551, %v1566
        %v1568 = vadd.f32 %v1567, 0.112945676
        %v1569 = vmul.f32 %v1551, %v1568
        %v1570 = vadd.f32 %v1569, 0.4994258
        %v1571 = vmul.f32 %v1551, %v1570
        %v1572 = vadd.f32 %v1571, 1.0
        %v1573 = vrcp.pop %v1572
        %v1574 = vmul.f32 %v1572, %v1573
        %v1575 = vsub.f32 1.0, %v1574
        %v1576 = vmul.f32 %v1573, %v1575
        %v1577 = vadd.f32 %v1573, %v1576
        %vm1578 = vweird.f32 %v1572
        %vm1579 = vweird.f32 %v1573
        %vm1580 = vmor %vm1578, %vm1579
        %v1581 = vsel %vm1580, %v1573, %v1577
        %v1582 = vand.u32 2147483647, %v1572
        %vm1583 = vcmp.eq.f32.partialorder %v1582, 8.507059e+37
        %v1584 = vand.u32 %v1572, 2147483648
        %v1585 = vor.u32 1.1754944e-38, %v1584
        %v1586 = vsel %vm1583, %v1585, %v1581
        %v1587 = vmul.f32 %v1562, %v1586
        %v1588 = vmin.f32 %v1587, 1.0
        %v1589 = vmax.f32 %v1588, -1.0
        %v1590 = vmul.f32 %v583, %v583
        %v1591 = vmin.f32 16.0, %v1590
        %v1592 = vmul.f32 %v1591, 2.1237322e-06
        %v1593 = vadd.f32 %v1592, 0.00028619796
        %v1594 = vmul.f32 %v1591, %v1593
        %v1595 = vadd.f32 %v1594, 0.0036580483
        %v1596 = vmul.f32 %v1591, %v1595
        %v1597 = vadd.f32 %v1596, 0.05243302
        %v1598 = vmul.f32 %v1591, %v1597
        %v1599 = vadd.f32 %v1598, 0.18741608
        %v1600 = vmul.f32 %v1591, %v1599
        %v1601 = vadd.f32 %v1600, 1.1283791
        %v1602 = vmul.f32 %v583, %v1601
        %v1603 = vmul.f32 %v1591, 3.8918573e-05
        %v1604 = vadd.f32 %v1603, 0.001143296
        %v1605 = vmul.f32 %v1591, %v1604
        %v1606 = vadd.f32 %v1605, 0.014752088
        %v1607 = vmul.f32 %v1591, %v1606
        %v1608 = vadd.f32 %v1607, 0.112945676
        %v1609 = vmul.f32 %v1591, %v1608
        %v1610 = vadd.f32 %v1609, 0.4994258
        %v1611 = vmul.f32 %v1591, %v1610
        %v1612 = vadd.f32 %v1611, 1.0
        %v1613 = vrcp.pop %v1612
        %v1614 = vmul.f32 %v1612, %v1613
        %v1615 = vsub.f32 1.0, %v1614
        %v1616 = vmul.f32 %v1613, %v1615
        %v1617 = vadd.f32 %v1613, %v1616
        %vm1618 = vweird.f32 %v1612
        %vm1619 = vweird.f32 %v1613
        %vm1620 = vmor %vm1618, %vm1619
        %v1621 = vsel %vm1620, %v1613, %v1617
        %v1622 = vand.u32 2147483647, %v1612
        %vm1623 = vcmp.eq.f32.partialorder %v1622, 8.507059e+37
        %v1624 = vand.u32 %v1612, 2147483648
        %v1625 = vor.u32 1.1754944e-38, %v1624
        %v1626 = vsel %vm1623, %v1625, %v1621
        %v1627 = vmul.f32 %v1602, %v1626
        %v1628 = vmin.f32 %v1627, 1.0
        %v1629 = vmax.f32 %v1628, -1.0
        %v1630 = vmul.f32 %v584, %v584
        %v1631 = vmin.f32 16.0, %v1630
        %v1632 = vmul.f32 %v1631, 2.1237322e-06
        %v1633 = vadd.f32 %v1632, 0.00028619796
        %v1634 = vmul.f32 %v1631, %v1633
        %v1635 = vadd.f32 %v1634, 0.0036580483
        %v1636 = vmul.f32 %v1631, %v1635
        %v1637 = vadd.f32 %v1636, 0.05243302
        %v1638 = vmul.f32 %v1631, %v1637
        %v1639 = vadd.f32 %v1638, 0.18741608
        %v1640 = vmul.f32 %v1631, %v1639
        %v1641 = vadd.f32 %v1640, 1.1283791
        %v1642 = vmul.f32 %v584, %v1641
        %v1643 = vmul.f32 %v1631, 3.8918573e-05
        %v1644 = vadd.f32 %v1643, 0.001143296
        %v1645 = vmul.f32 %v1631, %v1644
        %v1646 = vadd.f32 %v1645, 0.014752088
        %v1647 = vmul.f32 %v1631, %v1646
        %v1648 = vadd.f32 %v1647, 0.112945676
        %v1649 = vmul.f32 %v1631, %v1648
        %v1650 = vadd.f32 %v1649, 0.4994258
        %v1651 = vmul.f32 %v1631, %v1650
        %v1652 = vadd.f32 %v1651, 1.0
        %v1653 = vrcp.pop %v1652
        %v1654 = vmul.f32 %v1652, %v1653
        %v1655 = vsub.f32 1.0, %v1654
        %v1656 = vmul.f32 %v1653, %v1655
        %v1657 = vadd.f32 %v1653, %v1656
        %vm1658 = vweird.f32 %v1652
        %vm1659 = vweird.f32 %v1653
        %vm1660 = vmor %vm1658, %vm1659
        %v1661 = vsel %vm1660, %v1653, %v1657
        %v1662 = vand.u32 2147483647, %v1652
        %vm1663 = vcmp.eq.f32.partialorder %v1662, 8.507059e+37
        %v1664 = vand.u32 %v1652, 2147483648
        %v1665 = vor.u32 1.1754944e-38, %v1664
        %v1666 = vsel %vm1663, %v1665, %v1661
        %v1667 = vmul.f32 %v1642, %v1666
        %v1668 = vmin.f32 %v1667, 1.0
        %v1669 = vmax.f32 %v1668, -1.0
        %v1670 = vmul.f32 %v585, %v585
        %v1671 = vmin.f32 16.0, %v1670
        %v1672 = vmul.f32 %v1671, 2.1237322e-06
        %v1673 = vadd.f32 %v1672, 0.00028619796
        %v1674 = vmul.f32 %v1671, %v1673
        %v1675 = vadd.f32 %v1674, 0.0036580483
        %v1676 = vmul.f32 %v1671, %v1675
        %v1677 = vadd.f32 %v1676, 0.05243302
        %v1678 = vmul.f32 %v1671, %v1677
        %v1679 = vadd.f32 %v1678, 0.18741608
        %v1680 = vmul.f32 %v1671, %v1679
        %v1681 = vadd.f32 %v1680, 1.1283791
        %v1682 = vmul.f32 %v585, %v1681
        %v1683 = vmul.f32 %v1671, 3.8918573e-05
        %v1684 = vadd.f32 %v1683, 0.001143296
        %v1685 = vmul.f32 %v1671, %v1684
        %v1686 = vadd.f32 %v1685, 0.014752088
        %v1687 = vmul.f32 %v1671, %v1686
        %v1688 = vadd.f32 %v1687, 0.112945676
        %v1689 = vmul.f32 %v1671, %v1688
        %v1690 = vadd.f32 %v1689, 0.4994258
        %v1691 = vmul.f32 %v1671, %v1690
        %v1692 = vadd.f32 %v1691, 1.0
        %v1693 = vrcp.pop %v1692
        %v1694 = vmul.f32 %v1692, %v1693
        %v1695 = vsub.f32 1.0, %v1694
        %v1696 = vmul.f32 %v1693, %v1695
        %v1697 = vadd.f32 %v1693, %v1696
        %vm1698 = vweird.f32 %v1692
        %vm1699 = vweird.f32 %v1693
        %vm1700 = vmor %vm1698, %vm1699
        %v1701 = vsel %vm1700, %v1693, %v1697
        %v1702 = vand.u32 2147483647, %v1692
        %vm1703 = vcmp.eq.f32.partialorder %v1702, 8.507059e+37
        %v1704 = vand.u32 %v1692, 2147483648
        %v1705 = vor.u32 1.1754944e-38, %v1704
        %v1706 = vsel %vm1703, %v1705, %v1701
        %v1707 = vmul.f32 %v1682, %v1706
        %v1708 = vmin.f32 %v1707, 1.0
        %v1709 = vmax.f32 %v1708, -1.0
        %v1710 = vmul.f32 %v586, %v586
        %v1711 = vmin.f32 16.0, %v1710
        %v1712 = vmul.f32 %v1711, 2.1237322e-06
        %v1713 = vadd.f32 %v1712, 0.00028619796
        %v1714 = vmul.f32 %v1711, %v1713
        %v1715 = vadd.f32 %v1714, 0.0036580483
        %v1716 = vmul.f32 %v1711, %v1715
        %v1717 = vadd.f32 %v1716, 0.05243302
        %v1718 = vmul.f32 %v1711, %v1717
        %v1719 = vadd.f32 %v1718, 0.18741608
        %v1720 = vmul.f32 %v1711, %v1719
        %v1721 = vadd.f32 %v1720, 1.1283791
        %v1722 = vmul.f32 %v586, %v1721
        %v1723 = vmul.f32 %v1711, 3.8918573e-05
        %v1724 = vadd.f32 %v1723, 0.001143296
        %v1725 = vmul.f32 %v1711, %v1724
        %v1726 = vadd.f32 %v1725, 0.014752088
        %v1727 = vmul.f32 %v1711, %v1726
        %v1728 = vadd.f32 %v1727, 0.112945676
        %v1729 = vmul.f32 %v1711, %v1728
        %v1730 = vadd.f32 %v1729, 0.4994258
        %v1731 = vmul.f32 %v1711, %v1730
        %v1732 = vadd.f32 %v1731, 1.0
        %v1733 = vrcp.pop %v1732
        %v1734 = vmul.f32 %v1732, %v1733
        %v1735 = vsub.f32 1.0, %v1734
        %v1736 = vmul.f32 %v1733, %v1735
        %v1737 = vadd.f32 %v1733, %v1736
        %vm1738 = vweird.f32 %v1732
        %vm1739 = vweird.f32 %v1733
        %vm1740 = vmor %vm1738, %vm1739
        %v1741 = vsel %vm1740, %v1733, %v1737
        %v1742 = vand.u32 2147483647, %v1732
        %vm1743 = vcmp.eq.f32.partialorder %v1742, 8.507059e+37
        %v1744 = vand.u32 %v1732, 2147483648
        %v1745 = vor.u32 1.1754944e-38, %v1744
        %v1746 = vsel %vm1743, %v1745, %v1741
        %v1747 = vmul.f32 %v1722, %v1746
        %v1748 = vmin.f32 %v1747, 1.0
        %v1749 = vmax.f32 %v1748, -1.0
        %v1750 = vmul.f32 %v587, %v587
        %v1751 = vmin.f32 16.0, %v1750
        %v1752 = vmul.f32 %v1751, 2.1237322e-06
        %v1753 = vadd.f32 %v1752, 0.00028619796
        %v1754 = vmul.f32 %v1751, %v1753
        %v1755 = vadd.f32 %v1754, 0.0036580483
        %v1756 = vmul.f32 %v1751, %v1755
        %v1757 = vadd.f32 %v1756, 0.05243302
        %v1758 = vmul.f32 %v1751, %v1757
        %v1759 = vadd.f32 %v1758, 0.18741608
        %v1760 = vmul.f32 %v1751, %v1759
        %v1761 = vadd.f32 %v1760, 1.1283791
        %v1762 = vmul.f32 %v587, %v1761
        %v1763 = vmul.f32 %v1751, 3.8918573e-05
        %v1764 = vadd.f32 %v1763, 0.001143296
        %v1765 = vmul.f32 %v1751, %v1764
        %v1766 = vadd.f32 %v1765, 0.014752088
        %v1767 = vmul.f32 %v1751, %v1766
        %v1768 = vadd.f32 %v1767, 0.112945676
        %v1769 = vmul.f32 %v1751, %v1768
        %v1770 = vadd.f32 %v1769, 0.4994258
        %v1771 = vmul.f32 %v1751, %v1770
        %v1772 = vadd.f32 %v1771, 1.0
        %v1773 = vrcp.pop %v1772
        %v1774 = vmul.f32 %v1772, %v1773
        %v1775 = vsub.f32 1.0, %v1774
        %v1776 = vmul.f32 %v1773, %v1775
        %v1777 = vadd.f32 %v1773, %v1776
        %vm1778 = vweird.f32 %v1772
        %vm1779 = vweird.f32 %v1773
        %vm1780 = vmor %vm1778, %vm1779
        %v1781 = vsel %vm1780, %v1773, %v1777
        %v1782 = vand.u32 2147483647, %v1772
        %vm1783 = vcmp.eq.f32.partialorder %v1782, 8.507059e+37
        %v1784 = vand.u32 %v1772, 2147483648
        %v1785 = vor.u32 1.1754944e-38, %v1784
        %v1786 = vsel %vm1783, %v1785, %v1781
        %v1787 = vmul.f32 %v1762, %v1786
        %v1788 = vmin.f32 %v1787, 1.0
        %v1789 = vmax.f32 %v1788, -1.0
        %v1790 = vmul.f32 %v588, %v588
        %v1791 = vmin.f32 16.0, %v1790
        %v1792 = vmul.f32 %v1791, 2.1237322e-06
        %v1793 = vadd.f32 %v1792, 0.00028619796
        %v1794 = vmul.f32 %v1791, %v1793
        %v1795 = vadd.f32 %v1794, 0.0036580483
        %v1796 = vmul.f32 %v1791, %v1795
        %v1797 = vadd.f32 %v1796, 0.05243302
        %v1798 = vmul.f32 %v1791, %v1797
        %v1799 = vadd.f32 %v1798, 0.18741608
        %v1800 = vmul.f32 %v1791, %v1799
        %v1801 = vadd.f32 %v1800, 1.1283791
        %v1802 = vmul.f32 %v588, %v1801
        %v1803 = vmul.f32 %v1791, 3.8918573e-05
        %v1804 = vadd.f32 %v1803, 0.001143296
        %v1805 = vmul.f32 %v1791, %v1804
        %v1806 = vadd.f32 %v1805, 0.014752088
        %v1807 = vmul.f32 %v1791, %v1806
        %v1808 = vadd.f32 %v1807, 0.112945676
        %v1809 = vmul.f32 %v1791, %v1808
        %v1810 = vadd.f32 %v1809, 0.4994258
        %v1811 = vmul.f32 %v1791, %v1810
        %v1812 = vadd.f32 %v1811, 1.0
        %v1813 = vrcp.pop %v1812
        %v1814 = vmul.f32 %v1812, %v1813
        %v1815 = vsub.f32 1.0, %v1814
        %v1816 = vmul.f32 %v1813, %v1815
        %v1817 = vadd.f32 %v1813, %v1816
        %vm1818 = vweird.f32 %v1812
        %vm1819 = vweird.f32 %v1813
        %vm1820 = vmor %vm1818, %vm1819
        %v1821 = vsel %vm1820, %v1813, %v1817
        %v1822 = vand.u32 2147483647, %v1812
        %vm1823 = vcmp.eq.f32.partialorder %v1822, 8.507059e+37
        %v1824 = vand.u32 %v1812, 2147483648
        %v1825 = vor.u32 1.1754944e-38, %v1824
        %v1826 = vsel %vm1823, %v1825, %v1821
        %v1827 = vmul.f32 %v1802, %v1826
        %v1828 = vmin.f32 %v1827, 1.0
        %v1829 = vmax.f32 %v1828, -1.0
        %v1830 = vmul.f32 %v589, %v589
        %v1831 = vmin.f32 16.0, %v1830
        %v1832 = vmul.f32 %v1831, 2.1237322e-06
        %v1833 = vadd.f32 %v1832, 0.00028619796
        %v1834 = vmul.f32 %v1831, %v1833
        %v1835 = vadd.f32 %v1834, 0.0036580483
        %v1836 = vmul.f32 %v1831, %v1835
        %v1837 = vadd.f32 %v1836, 0.05243302
        %v1838 = vmul.f32 %v1831, %v1837
        %v1839 = vadd.f32 %v1838, 0.18741608
        %v1840 = vmul.f32 %v1831, %v1839
        %v1841 = vadd.f32 %v1840, 1.1283791
        %v1842 = vmul.f32 %v589, %v1841
        %v1843 = vmul.f32 %v1831, 3.8918573e-05
        %v1844 = vadd.f32 %v1843, 0.001143296
        %v1845 = vmul.f32 %v1831, %v1844
        %v1846 = vadd.f32 %v1845, 0.014752088
        %v1847 = vmul.f32 %v1831, %v1846
        %v1848 = vadd.f32 %v1847, 0.112945676
        %v1849 = vmul.f32 %v1831, %v1848
        %v1850 = vadd.f32 %v1849, 0.4994258
        %v1851 = vmul.f32 %v1831, %v1850
        %v1852 = vadd.f32 %v1851, 1.0
        %v1853 = vrcp.pop %v1852
        %v1854 = vmul.f32 %v1852, %v1853
        %v1855 = vsub.f32 1.0, %v1854
        %v1856 = vmul.f32 %v1853, %v1855
        %v1857 = vadd.f32 %v1853, %v1856
        %vm1858 = vweird.f32 %v1852
        %vm1859 = vweird.f32 %v1853
        %vm1860 = vmor %vm1858, %vm1859
        %v1861 = vsel %vm1860, %v1853, %v1857
        %v1862 = vand.u32 2147483647, %v1852
        %vm1863 = vcmp.eq.f32.partialorder %v1862, 8.507059e+37
        %v1864 = vand.u32 %v1852, 2147483648
        %v1865 = vor.u32 1.1754944e-38, %v1864
        %v1866 = vsel %vm1863, %v1865, %v1861
        %v1867 = vmul.f32 %v1842, %v1866
        %v1868 = vmin.f32 %v1867, 1.0
        %v1869 = vmax.f32 %v1868, -1.0
        %v1870 = vadd.f32 %v629, 1.0
        %v1871 = vadd.f32 %v669, 1.0
        %v1872 = vadd.f32 %v709, 1.0
        %v1873 = vadd.f32 %v749, 1.0
        %v1874 = vadd.f32 %v789, 1.0
        %v1875 = vadd.f32 %v829, 1.0
        %v1876 = vadd.f32 %v869, 1.0
        %v1877 = vadd.f32 %v909, 1.0
        %v1878 = vadd.f32 %v949, 1.0
        %v1879 = vadd.f32 %v989, 1.0
        %v1880 = vadd.f32 %v1029, 1.0
        %v1881 = vadd.f32 %v1069, 1.0
        %v1882 = vadd.f32 %v1109, 1.0
        %v1883 = vadd.f32 %v1149, 1.0
        %v1884 = vadd.f32 %v1189, 1.0
        %v1885 = vadd.f32 %v1229, 1.0
        %v1886 = vadd.f32 %v1269, 1.0
        %v1887 = vadd.f32 %v1309, 1.0
        %v1888 = vadd.f32 %v1349, 1.0
        %v1889 = vadd.f32 %v1389, 1.0
        %v1890 = vadd.f32 %v1429, 1.0
        %v1891 = vadd.f32 %v1469, 1.0
        %v1892 = vadd.f32 %v1509, 1.0
        %v1893 = vadd.f32 %v1549, 1.0
        %v1894 = vadd.f32 %v1589, 1.0
        %v1895 = vadd.f32 %v1629, 1.0
        %v1896 = vadd.f32 %v1669, 1.0
        %v1897 = vadd.f32 %v1709, 1.0
        %v1898 = vadd.f32 %v1749, 1.0
        %v1899 = vadd.f32 %v1789, 1.0
        %v1900 = vadd.f32 %v1829, 1.0
        %v1901 = vadd.f32 %v1869, 1.0
        %v1902 = vmul.f32 %v526, %v1870
        %v1903 = vmul.f32 %v527, %v1871
        %v1904 = vmul.f32 %v528, %v1872
        %v1905 = vmul.f32 %v529, %v1873
        %v1906 = vmul.f32 %v530, %v1874
        %v1907 = vmul.f32 %v531, %v1875
        %v1908 = vmul.f32 %v532, %v1876
        %v1909 = vmul.f32 %v533, %v1877
        %v1910 = vmul.f32 %v534, %v1878
        %v1911 = vmul.f32 %v535, %v1879
        %v1912 = vmul.f32 %v536, %v1880
        %v1913 = vmul.f32 %v537, %v1881
        %v1914 = vmul.f32 %v538, %v1882
        %v1915 = vmul.f32 %v539, %v1883
        %v1916 = vmul.f32 %v540, %v1884
        %v1917 = vmul.f32 %v541, %v1885
        %v1918 = vmul.f32 %v542, %v1886
        %v1919 = vmul.f32 %v543, %v1887
        %v1920 = vmul.f32 %v544, %v1888
        %v1921 = vmul.f32 %v545, %v1889
        %v1922 = vmul.f32 %v546, %v1890
        %v1923 = vmul.f32 %v547, %v1891
        %v1924 = vmul.f32 %v548, %v1892
        %v1925 = vmul.f32 %v549, %v1893
        %v1926 = vmul.f32 %v550, %v1894
        %v1927 = vmul.f32 %v551, %v1895
        %v1928 = vmul.f32 %v552, %v1896
        %v1929 = vmul.f32 %v553, %v1897
        %v1930 = vmul.f32 %v554, %v1898
        %v1931 = vmul.f32 %v555, %v1899
        %v1932 = vmul.f32 %v556, %v1900
        %v1933 = vmul.f32 %v557, %v1901
        %v1934 = vld [vmem:[#allocation7] sm:$0xff]
        %v1935 = vld [vmem:[#allocation7 + $0x8] sm:$0xff]
        %v1936 = vld [vmem:[#allocation7 + $0x10] sm:$0xff]
        %v1937 = vld [vmem:[#allocation7 + $0x18] sm:$0xff]
        %v1938 = vld [vmem:[#allocation7 + $0x20] sm:$0xff]
        %v1939 = vld [vmem:[#allocation7 + $0x28] sm:$0xff]
        %v1940 = vld [vmem:[#allocation7 + $0x30] sm:$0xff]
        %v1941 = vld [vmem:[#allocation7 + $0x38] sm:$0xff]
        %v1942 = vld [vmem:[#allocation7 + $0x40] sm:$0xff]
        %v1943 = vld [vmem:[#allocation7 + $0x48] sm:$0xff]
        %v1944 = vld [vmem:[#allocation7 + $0x50] sm:$0xff]
        %v1945 = vld [vmem:[#allocation7 + $0x58] sm:$0xff]
        %v1946 = vld [vmem:[#allocation7 + $0x60] sm:$0xff]
        %v1947 = vld [vmem:[#allocation7 + $0x68] sm:$0xff]
        %v1948 = vld [vmem:[#allocation7 + $0x70] sm:$0xff]
        %v1949 = vld [vmem:[#allocation7 + $0x78] sm:$0xff]
        %v1950 = vld [vmem:[#allocation7 + $0x80] sm:$0xff]
        %v1951 = vld [vmem:[#allocation7 + $0x88] sm:$0xff]
        %v1952 = vld [vmem:[#allocation7 + $0x90] sm:$0xff]
        %v1953 = vld [vmem:[#allocation7 + $0x98] sm:$0xff]
        %v1954 = vld [vmem:[#allocation7 + $0xa0] sm:$0xff]
        %v1955 = vld [vmem:[#allocation7 + $0xa8] sm:$0xff]
        %v1956 = vld [vmem:[#allocation7 + $0xb0] sm:$0xff]
        %v1957 = vld [vmem:[#allocation7 + $0xb8] sm:$0xff]
        %v1958 = vld [vmem:[#allocation7 + $0xc0] sm:$0xff]
        %v1959 = vld [vmem:[#allocation7 + $0xc8] sm:$0xff]
        %v1960 = vld [vmem:[#allocation7 + $0xd0] sm:$0xff]
        %v1961 = vld [vmem:[#allocation7 + $0xd8] sm:$0xff]
        %v1962 = vld [vmem:[#allocation7 + $0xe0] sm:$0xff]
        %v1963 = vld [vmem:[#allocation7 + $0xe8] sm:$0xff]
        %v1964 = vld [vmem:[#allocation7 + $0xf0] sm:$0xff]
        %v1965 = vld [vmem:[#allocation7 + $0xf8] sm:$0xff]
        %v1966 = vld [vmem:[#allocation7 + $0x100] sm:$0xff]
        %v1967 = vld [vmem:[#allocation7 + $0x108] sm:$0xff]
        %v1968 = vld [vmem:[#allocation7 + $0x110] sm:$0xff]
        %v1969 = vld [vmem:[#allocation7 + $0x118] sm:$0xff]
        %v1970 = vld [vmem:[#allocation7 + $0x120] sm:$0xff]
        %v1971 = vld [vmem:[#allocation7 + $0x128] sm:$0xff]
        %v1972 = vld [vmem:[#allocation7 + $0x130] sm:$0xff]
        %v1973 = vld [vmem:[#allocation7 + $0x138] sm:$0xff]
        %v1974 = vld [vmem:[#allocation7 + $0x140] sm:$0xff]
        %v1975 = vld [vmem:[#allocation7 + $0x148] sm:$0xff]
        %v1976 = vld [vmem:[#allocation7 + $0x150] sm:$0xff]
        %v1977 = vld [vmem:[#allocation7 + $0x158] sm:$0xff]
        %v1978 = vld [vmem:[#allocation7 + $0x160] sm:$0xff]
        %v1979 = vld [vmem:[#allocation7 + $0x168] sm:$0xff]
        %v1980 = vld [vmem:[#allocation7 + $0x170] sm:$0xff]
        %v1981 = vld [vmem:[#allocation7 + $0x178] sm:$0xff]
        %v1982 = vld [vmem:[#allocation7 + $0x180] sm:$0xff]
        %v1983 = vld [vmem:[#allocation7 + $0x188] sm:$0xff]
        %v1984 = vld [vmem:[#allocation7 + $0x190] sm:$0xff]
        %v1985 = vld [vmem:[#allocation7 + $0x198] sm:$0xff]
        %v1986 = vld [vmem:[#allocation7 + $0x1a0] sm:$0xff]
        %v1987 = vld [vmem:[#allocation7 + $0x1a8] sm:$0xff]
        %v1988 = vld [vmem:[#allocation7 + $0x1b0] sm:$0xff]
        %v1989 = vld [vmem:[#allocation7 + $0x1b8] sm:$0xff]
        %v1990 = vld [vmem:[#allocation7 + $0x1c0] sm:$0xff]
        %v1991 = vld [vmem:[#allocation7 + $0x1c8] sm:$0xff]
        %v1992 = vld [vmem:[#allocation7 + $0x1d0] sm:$0xff]
        %v1993 = vld [vmem:[#allocation7 + $0x1d8] sm:$0xff]
        %v1994 = vld [vmem:[#allocation7 + $0x1e0] sm:$0xff]
        %v1995 = vld [vmem:[#allocation7 + $0x1e8] sm:$0xff]
        %v1996 = vld [vmem:[#allocation7 + $0x1f0] sm:$0xff]
        %v1997 = vld [vmem:[#allocation7 + $0x1f8] sm:$0xff]
        %v1998 = vld [vmem:[%s4] sm:$0x1]
        %v2000 = vperm.slane %v1998, 0
        %2002 = vmatpush.msra.mxu0 %v1949
        %2003 = vmatpush.msra.mxu0 %v1948
        %2004 = vmatpush.msra.mxu0 %v1947
        %2005 = vmatpush.msra.mxu0 %v1946
        %2006 = vmatpush.msra.mxu0 %v1945
        %2007 = vmatpush.msra.mxu0 %v1944
        %2008 = vmatpush.msra.mxu0 %v1943
        %2009 = vmatpush.msra.mxu0 %v1942
        %2010 = vmatpush.msra.mxu0 %v1941
        %2011 = vmatpush.msra.mxu0 %v1940
        %2012 = vmatpush.msra.mxu0 %v1939
        %2013 = vmatpush.msra.mxu0 %v1938
        %2014 = vmatpush.msra.mxu0 %v1937
        %2015 = vmatpush.msra.mxu0 %v1936
        %2016 = vmatpush.msra.mxu0 %v1935
        %2017 = vmatpush.msra.mxu0 %v1934
        %2018 = vmatmul.f32.gmra.mxu0 %v1902
        %v2019 = vpop.f32.mrf.mxu0
        %v2020 = vadd.f32 %v2000, %v2019
        %2021 = vmatmul.f32.gmra.mxu0 %v1906
        %v2022 = vpop.f32.mrf.mxu0
        %v2023 = vadd.f32 %v2000, %v2022
        %2024 = vmatmul.f32.gmra.mxu0 %v1910
        %v2025 = vpop.f32.mrf.mxu0
        %v2026 = vadd.f32 %v2000, %v2025
        %2027 = vmatmul.f32.gmra.mxu0 %v1914
        %v2028 = vpop.f32.mrf.mxu0
        %v2029 = vadd.f32 %v2000, %v2028
        %2030 = vmatmul.f32.gmra.mxu0 %v1918
        %v2031 = vpop.f32.mrf.mxu0
        %v2032 = vadd.f32 %v2000, %v2031
        %2033 = vmatmul.f32.gmra.mxu0 %v1922
        %v2034 = vpop.f32.mrf.mxu0
        %v2035 = vadd.f32 %v2000, %v2034
        %2036 = vmatmul.f32.gmra.mxu0 %v1926
        %v2037 = vpop.f32.mrf.mxu0
        %v2038 = vadd.f32 %v2000, %v2037
        %2039 = vmatmul.f32.gmra.mxu0 %v1930
        %v2040 = vpop.f32.mrf.mxu0
        %v2041 = vadd.f32 %v2000, %v2040
        %2042 = vdwg.mxu0
        %2043 = vmatpush.msra.mxu0 %v1965
        %2044 = vmatpush.msra.mxu0 %v1964
        %2045 = vmatpush.msra.mxu0 %v1963
        %2046 = vmatpush.msra.mxu0 %v1962
        %2047 = vmatpush.msra.mxu0 %v1961
        %2048 = vmatpush.msra.mxu0 %v1960
        %2049 = vmatpush.msra.mxu0 %v1959
        %2050 = vmatpush.msra.mxu0 %v1958
        %2051 = vmatpush.msra.mxu0 %v1957
        %2052 = vmatpush.msra.mxu0 %v1956
        %2053 = vmatpush.msra.mxu0 %v1955
        %2054 = vmatpush.msra.mxu0 %v1954
        %2055 = vmatpush.msra.mxu0 %v1953
        %2056 = vmatpush.msra.mxu0 %v1952
        %2057 = vmatpush.msra.mxu0 %v1951
        %2058 = vmatpush.msra.mxu0 %v1950
        %2059 = vmatmul.f32.gmra.mxu0 %v1903
        %v2060 = vpop.f32.mrf.mxu0
        %v2061 = vadd.f32 %v2020, %v2060
        %2062 = vmatmul.f32.gmra.mxu0 %v1907
        %v2063 = vpop.f32.mrf.mxu0
        %v2064 = vadd.f32 %v2023, %v2063
        %2065 = vmatmul.f32.gmra.mxu0 %v1911
        %v2066 = vpop.f32.mrf.mxu0
        %v2067 = vadd.f32 %v2026, %v2066
        %2068 = vmatmul.f32.gmra.mxu0 %v1915
        %v2069 = vpop.f32.mrf.mxu0
        %v2070 = vadd.f32 %v2029, %v2069
        %2071 = vmatmul.f32.gmra.mxu0 %v1919
        %v2072 = vpop.f32.mrf.mxu0
        %v2073 = vadd.f32 %v2032, %v2072
        %2074 = vmatmul.f32.gmra.mxu0 %v1923
        %v2075 = vpop.f32.mrf.mxu0
        %v2076 = vadd.f32 %v2035, %v2075
        %2077 = vmatmul.f32.gmra.mxu0 %v1927
        %v2078 = vpop.f32.mrf.mxu0
        %v2079 = vadd.f32 %v2038, %v2078
        %2080 = vmatmul.f32.gmra.mxu0 %v1931
        %v2081 = vpop.f32.mrf.mxu0
        %v2082 = vadd.f32 %v2041, %v2081
        %2083 = vdwg.mxu0
        %2084 = vmatpush.msra.mxu0 %v1981
        %2085 = vmatpush.msra.mxu0 %v1980
        %2086 = vmatpush.msra.mxu0 %v1979
        %2087 = vmatpush.msra.mxu0 %v1978
        %2088 = vmatpush.msra.mxu0 %v1977
        %2089 = vmatpush.msra.mxu0 %v1976
        %2090 = vmatpush.msra.mxu0 %v1975
        %2091 = vmatpush.msra.mxu0 %v1974
        %2092 = vmatpush.msra.mxu0 %v1973
        %2093 = vmatpush.msra.mxu0 %v1972
        %2094 = vmatpush.msra.mxu0 %v1971
        %2095 = vmatpush.msra.mxu0 %v1970
        %2096 = vmatpush.msra.mxu0 %v1969
        %2097 = vmatpush.msra.mxu0 %v1968
        %2098 = vmatpush.msra.mxu0 %v1967
        %2099 = vmatpush.msra.mxu0 %v1966
        %2100 = vmatmul.f32.gmra.mxu0 %v1904
        %v2101 = vpop.f32.mrf.mxu0
        %v2102 = vadd.f32 %v2061, %v2101
        %2103 = vmatmul.f32.gmra.mxu0 %v1908
        %v2104 = vpop.f32.mrf.mxu0
        %v2105 = vadd.f32 %v2064, %v2104
        %2106 = vmatmul.f32.gmra.mxu0 %v1912
        %v2107 = vpop.f32.mrf.mxu0
        %v2108 = vadd.f32 %v2067, %v2107
        %2109 = vmatmul.f32.gmra.mxu0 %v1916
        %v2110 = vpop.f32.mrf.mxu0
        %v2111 = vadd.f32 %v2070, %v2110
        %2112 = vmatmul.f32.gmra.mxu0 %v1920
        %v2113 = vpop.f32.mrf.mxu0
        %v2114 = vadd.f32 %v2073, %v2113
        %2115 = vmatmul.f32.gmra.mxu0 %v1924
        %v2116 = vpop.f32.mrf.mxu0
        %v2117 = vadd.f32 %v2076, %v2116
        %2118 = vmatmul.f32.gmra.mxu0 %v1928
        %v2119 = vpop.f32.mrf.mxu0
        %v2120 = vadd.f32 %v2079, %v2119
        %2121 = vmatmul.f32.gmra.mxu0 %v1932
        %v2122 = vpop.f32.mrf.mxu0
        %v2123 = vadd.f32 %v2082, %v2122
        %2124 = vdwg.mxu0
        %2125 = vmatpush.msra.mxu0 %v1997
        %2126 = vmatpush.msra.mxu0 %v1996
        %2127 = vmatpush.msra.mxu0 %v1995
        %2128 = vmatpush.msra.mxu0 %v1994
        %2129 = vmatpush.msra.mxu0 %v1993
        %2130 = vmatpush.msra.mxu0 %v1992
        %2131 = vmatpush.msra.mxu0 %v1991
        %2132 = vmatpush.msra.mxu0 %v1990
        %2133 = vmatpush.msra.mxu0 %v1989
        %2134 = vmatpush.msra.mxu0 %v1988
        %2135 = vmatpush.msra.mxu0 %v1987
        %2136 = vmatpush.msra.mxu0 %v1986
        %2137 = vmatpush.msra.mxu0 %v1985
        %2138 = vmatpush.msra.mxu0 %v1984
        %2139 = vmatpush.msra.mxu0 %v1983
        %2140 = vmatpush.msra.mxu0 %v1982
        %2141 = vmatmul.f32.gmra.mxu0 %v1905
        %v2142 = vpop.f32.mrf.mxu0
        %v2143 = vadd.f32 %v2102, %v2142
        %2144 = vmatmul.f32.gmra.mxu0 %v1909
        %v2145 = vpop.f32.mrf.mxu0
        %v2146 = vadd.f32 %v2105, %v2145
        %2147 = vmatmul.f32.gmra.mxu0 %v1913
        %v2148 = vpop.f32.mrf.mxu0
        %v2149 = vadd.f32 %v2108, %v2148
        %2150 = vmatmul.f32.gmra.mxu0 %v1917
        %v2151 = vpop.f32.mrf.mxu0
        %v2152 = vadd.f32 %v2111, %v2151
        %2153 = vmatmul.f32.gmra.mxu0 %v1921
        %v2154 = vpop.f32.mrf.mxu0
        %v2155 = vadd.f32 %v2114, %v2154
        %2156 = vmatmul.f32.gmra.mxu0 %v1925
        %v2157 = vpop.f32.mrf.mxu0
        %v2158 = vadd.f32 %v2117, %v2157
        %2159 = vmatmul.f32.gmra.mxu0 %v1929
        %v2160 = vpop.f32.mrf.mxu0
        %v2161 = vadd.f32 %v2120, %v2160
        %2162 = vmatmul.f32.gmra.mxu0 %v1933
        %v2163 = vpop.f32.mrf.mxu0
        %v2164 = vadd.f32 %v2123, %v2163
        %2165 = vdwg.mxu0
        %2166 = vst [vmem:[%s277] sm:$0xff] %v2143
        %2167 = vst [vmem:[%s277 + $0x8] sm:$0xff] %v2146
        %2168 = vst [vmem:[%s277 + $0x10] sm:$0xff] %v2149
        %2169 = vst [vmem:[%s277 + $0x18] sm:$0xff] %v2152
        %2170 = vst [vmem:[%s277 + $0x20] sm:$0xff] %v2155
        %2171 = vst [vmem:[%s277 + $0x28] sm:$0xff] %v2158
        %2172 = vst [vmem:[%s277 + $0x30] sm:$0xff] %v2161
        %2173 = vst [vmem:[%s277 + $0x38] sm:$0xff] %v2164
        %s2174 = sand.u32 %s141, 1
        %s2175 = scalar_lea.sflag [#allocation4], %s2174
        %s2176 = sand.u32 %s141, 1
        %s2177 = smul.addr %s2176, 64
        %s2178 = scalar_lea.vmem [#allocation8], %s2177
        // Predicated region
        $region53: #{position_wise_ffn.1} parent=39 // pred_check
          %p2179 = pneg %p151
        $region54: #{position_wise_ffn.1} parent=39 // pred_check_branch
          %2181 = sbr.rel (%p2179) target = $region56
        $region55: #{position_wise_ffn.1} parent=39 // pred_region
          %s2182 = smul.u32 8, %s23
          %2184 = vsyncadd %s2175, 0
          %s2185 = smul.addr %s2182, 8
          %s2186 = scalar_lea.hbm %s5, %s2185
          %s2187 = sshll.u32 %s2178, 4
          %s2188 = int_to_ptr.vmem [resolvable:$true] %s2187
          %s2189 = sshll.u32 %s2186, 4
          %s2190 = int_to_ptr.hbm [resolvable:$true] %s2189
          %2195 = dma.vmem_to_hbm [thread:$0]  %s2188, 1024, %s2190, %s2175, 128, 128, 8
        $region56: #{position_wise_ffn.1} parent=39 // pred_fallthru
          _
      $region40: #{position_wise_ffn.1} parent=5 // pred_fallthru
        _
      %p2196 = scmp.le.s32.totalorder 2, %s18
      // Predicated region
      $region57: #{position_wise_ffn.1} parent=5 // pred_check
        %p2197 = pneg %p2196
      $region58: #{position_wise_ffn.1} parent=5 // pred_check_branch
        %2199 = sbr.rel (%p2197) target = $region60
      $region59: #{position_wise_ffn.1} parent=5 // pred_region
        %s2200 = ssub.s32 %s18, 2
        // Predicated region
        $region61: #{position_wise_ffn.1} parent=59 // pred_check
          %p2201 = pneg %p157
        $region62: #{position_wise_ffn.1} parent=59 // pred_check_branch
          %2203 = sbr.rel (%p2201) target = $region64
        $region63: #{position_wise_ffn.1} parent=59 // pred_region
          %s2204 = sand.u32 %s142, 1
          %s2205 = scalar_lea.sflag [#allocation4], %s2204
          %s2206 = sand.u32 %s142, 1
          %s2207 = smul.addr %s2206, 64
          %s2208 = scalar_lea.vmem [#allocation8], %s2207
          %2210 = dma.done %s2205, 1024
        $region64: #{position_wise_ffn.1} parent=59 // pred_fallthru
          _
      $region60: #{position_wise_ffn.1} parent=5 // pred_fallthru
        _
    $region6: #{position_wise_ffn.1} parent=1 // loop_footer
      %s22 = sadd.s32 1, %s18
    $region7: #{position_wise_ffn.1} parent=1 // loop_footer_branch
      %17 = sbr.rel target = $region3
    $region8: #{position_wise_ffn.1} parent=1 // loop_exit
      _
    %2211 = vsyncpa [#allocation3], 1
    %s2212 = scalar_lea.sflag [#allocation3], 1
    %2213 = vsyncpa %s2212, 1
    %2214 = vsyncpa [#allocation6], 1
    %2215 = vsyncpa [#allocation4], 1
    %s2216 = scalar_lea.sflag [#allocation4], 1
    %2217 = vsyncpa %s2216, 1

</llo_original>
